<compile_context>
chip_gen: v7x
topology: tpu7x:2x2x1
jax: 0.10.0
libtpu: 0.0.40
codegen_flags: <defaults>
</compile_context>

<pallas_src>
import functools

import jax
import jax.numpy as jnp
import numpy as np
from jax.experimental import pallas as pl
from jax.experimental.pallas import tpu as pltpu

EPS = 1e-6                       # matches L2Norm(eps=1e-6) / F.normalize eps
F32 = jnp.float32
BF16 = jnp.bfloat16
VMEM_LIMIT = 48 * 1024 * 1024    # explicit scoped-VMEM budget (safe on all gens)


def _l2norm(x):
    # F.normalize(x, dim=-1, p=2, eps=EPS) == x / max(||x||_2, EPS)
    ss = jnp.sum(x * x, axis=-1, keepdims=True)
    return x * jax.lax.rsqrt(jnp.maximum(ss, EPS * EPS))


def _pick_block(n, candidates):
    for c in candidates:
        if n % c == 0:
            return c
    return n


def _cparams(*sems):
    return pltpu.CompilerParams(dimension_semantics=sems,
                                vmem_limit_bytes=VMEM_LIMIT)


# --------------------------------------------------------------------------
# Pallas kernels
# --------------------------------------------------------------------------
def qkv_rope_kernel(x_ref, wqkv_ref, cos_ref, sin_ref, q_ref, kv_ref, *,
                    n_embd, n_heads, dim_head):
    """Fused QKV projection + rotary for a tile of rows."""
    C, H, hd2 = n_embd, n_heads, dim_head // 2
    C2 = C // 2
    x = x_ref[0]                                            # (TM, C) f32
    qkv = jnp.dot(x.astype(BF16), wqkv_ref[...],
                  preferred_element_type=F32)               # one MXU matmul
    q, k, v = qkv[:, :C], qkv[:, C:2 * C], qkv[:, 2 * C:]

    cos, sin = cos_ref[...], sin_ref[...]                   # (TM, C/2) lane-dense
    q1, q2 = q[:, :C2], q[:, C2:]
    k1, k2 = k[:, :C2], k[:, C2:]
    rq1, rq2 = q1 * cos - q2 * sin, q2 * cos + q1 * sin     # full-width rotary
    rk1, rk2 = k1 * cos - k2 * sin, k2 * cos + k1 * sin

    # Re-pack so every head's rotated dim_head features are contiguous; the
    # attention kernel can then do ONE K=dim_head score matmul per head.
    def per_head(a1, a2):
        return jnp.concatenate(
            [blk for h in range(H)
             for blk in (a1[:, h * hd2:(h + 1) * hd2],
                         a2[:, h * hd2:(h + 1) * hd2])], axis=-1)

    q_ref[0] = per_head(rq1, rq2).astype(BF16)
    kv_ref[0] = jnp.concatenate([per_head(rk1, rk2), v], axis=-1).astype(BF16)


def attn_core_kernel(x_ref, q_ref, kv_ref, wo_ref, lscale_ref, o_ref, *,
                     n_heads, dim_head, q_block):
    """Causal attention + c_proj + Lerp_Residual for one (batch, q-tile)."""
    H, dh = n_heads, dim_head
    x = x_ref[0]                                            # (TQ, C) f32 residual
    q = q_ref[0]                                            # (TQ, C) bf16 rotated
    kv = kv_ref[0]                                          # (T, 2C) bf16
    TQ, C = x.shape
    T = kv.shape[0]
    k, v = kv[:, :C], kv[:, C:]

    r0 = pl.program_id(1) * q_block
    row = jax.lax.broadcasted_iota(jnp.int32, (TQ, T), 0) + r0
    col = jax.lax.broadcasted_iota(jnp.int32, (TQ, T), 1)
    causal = row >= col
    sm_scale = 1.0 / (dh ** 0.5)                            # SDPA default scale
    nt = (((1,), (1,)), ((), ()))                           # a @ b.T

    heads = []
    for h in range(H):
        lo = h * dh
        s = jax.lax.dot_general(q[:, lo:lo + dh], k[:, lo:lo + dh], nt,
                                preferred_element_type=F32) * sm_scale
        s = jnp.where(causal, s, -1e30)
        s = s - jnp.max(s, axis=-1, keepdims=True)
        p = jnp.exp(s)
        p = p * pl.reciprocal(jnp.sum(p, axis=-1, keepdims=True), approx=True)
        heads.append(jnp.dot(p.astype(BF16), v[:, lo:lo + dh],
                             preferred_element_type=F32))
    attn = jnp.concatenate(heads, axis=-1)                  # (TQ, C) staging

    y = jnp.dot(attn.astype(BF16), wo_ref[...],
                preferred_element_type=F32)                 # ONE c_proj matmul
    y = _l2norm(y)
    out = x + lscale_ref[...] * (y - x)                     # Lerp_Residual
    o_ref[0] = _l2norm(out).astype(o_ref.dtype)


def ffn_kernel(x_ref, w13_ref, w2_ref, lscale_ref, o_ref, *, hidden_dim):
    """Lerp_Residual(FeedForward) for a tile of flattened (B*T, C) rows."""
    x = x_ref[...]                                          # (TM, C) f32
    uv = jnp.dot(x.astype(BF16), w13_ref[...],
                 preferred_element_type=F32)                # fused w1 | w3
    u, v = uv[:, :hidden_dim], uv[:, hidden_dim:]           # scales pre-folded
    g = v * jax.nn.sigmoid(v)                               # SiLU
    y = jnp.dot((g * u).astype(BF16), w2_ref[...], preferred_element_type=F32)
    y = _l2norm(y)
    out = x + lscale_ref[...] * (y - x)
    o_ref[...] = _l2norm(out).astype(o_ref.dtype)


def logits_kernel(x_ref, w_ref, s_ref, o_ref):
    y = jnp.dot(x_ref[...].astype(BF16), w_ref[...], preferred_element_type=F32)
    o_ref[...] = (y * s_ref[...]).astype(o_ref.dtype)


# --------------------------------------------------------------------------
# Wrappers (pallas_call plumbing)
# --------------------------------------------------------------------------
def qkv_rope(x, p, *, n_heads, dim_head):
    B, T, C = x.shape
    C2 = C // 2
    TM = _pick_block(T, (256, 128, 64, 32, 16, 8))
    kernel = functools.partial(qkv_rope_kernel, n_embd=C, n_heads=n_heads,
                               dim_head=dim_head)
    return pl.pallas_call(
        kernel,
        out_shape=(jax.ShapeDtypeStruct((B, T, C), BF16),
                   jax.ShapeDtypeStruct((B, T, 2 * C), BF16)),
        grid=(B, T // TM),
        in_specs=[
            pl.BlockSpec((1, TM, C), lambda b, t: (b, t, 0)),        # x rows
            pl.BlockSpec((C, 3 * C), lambda b, t: (0, 0)),           # Wqkv^T
            pl.BlockSpec((TM, C2), lambda b, t: (t, 0)),             # cos rows
            pl.BlockSpec((TM, C2), lambda b, t: (t, 0)),             # sin rows
        ],
        out_specs=[pl.BlockSpec((1, TM, C), lambda b, t: (b, t, 0)),
                   pl.BlockSpec((1, TM, 2 * C), lambda b, t: (b, t, 0))],
        compiler_params=_cparams("parallel", "parallel"),
    )(x, p["wqkv_t"], p["cos"], p["sin"])


def attn_core(x, q_rot, kv, p, *, n_heads, dim_head):
    B, T, C = x.shape
    TQ = _pick_block(T, (256, 128, 64, 32, 16, 8))
    kernel = functools.partial(attn_core_kernel, n_heads=n_heads,
                               dim_head=dim_head, q_block=TQ)
    return pl.pallas_call(
        kernel,
        out_shape=jax.ShapeDtypeStruct((B, T, C), x.dtype),
        grid=(B, T // TQ),
        in_specs=[
            pl.BlockSpec((1, TQ, C), lambda b, i: (b, i, 0)),        # x (residual)
            pl.BlockSpec((1, TQ, C), lambda b, i: (b, i, 0)),        # q_rot tile
            pl.BlockSpec((1, T, 2 * C), lambda b, i: (b, 0, 0)),     # k|v full seq
            pl.BlockSpec((C, C), lambda b, i: (0, 0)),               # Wo^T
            pl.BlockSpec((1, C), lambda b, i: (0, 0)),               # lerp scale
        ],
        out_specs=pl.BlockSpec((1, TQ, C), lambda b, i: (b, i, 0)),
        compiler_params=_cparams("parallel", "parallel"),
    )(x, q_rot, kv, p["wo_t"], p["lerp_scale"])


def attention_block(x, p, *, n_heads, dim_head):
    q_rot, kv = qkv_rope(x, p, n_heads=n_heads, dim_head=dim_head)
    return attn_core(x, q_rot, kv, p, n_heads=n_heads, dim_head=dim_head)


def ffn_block(x, p, hidden_dim):
    B, T, C = x.shape
    N = B * T
    TM = _pick_block(N, (256, 128, 64, 32, 16, 8))
    kernel = functools.partial(ffn_kernel, hidden_dim=hidden_dim)
    out = pl.pallas_call(
        kernel,
        out_shape=jax.ShapeDtypeStruct((N, C), x.dtype),
        grid=(N // TM,),
        in_specs=[
            pl.BlockSpec((TM, C), lambda i: (i, 0)),
            pl.BlockSpec((C, 2 * hidden_dim), lambda i: (0, 0)),     # w1|w3 fused
            pl.BlockSpec((hidden_dim, C), lambda i: (0, 0)),
            pl.BlockSpec((1, C), lambda i: (0, 0)),
        ],
        out_specs=pl.BlockSpec((TM, C), lambda i: (i, 0)),
        compiler_params=_cparams("parallel"),
    )(x.reshape(N, C), p["w13_t"], p["w2_t"], p["lerp_scale"])
    return out.reshape(B, T, C)


def logits_block(x, wl_t, scale_logits):
    B, T, C = x.shape
    V = wl_t.shape[1]
    N = B * T
    TM = _pick_block(N, (256, 128, 64, 32, 16, 8))
    TN = _pick_block(V, (1024, 512, 256, 128))
    out = pl.pallas_call(
        logits_kernel,
        out_shape=jax.ShapeDtypeStruct((N, V), x.dtype),
        grid=(N // TM, V // TN),
        in_specs=[
            pl.BlockSpec((TM, C), lambda i, j: (i, 0)),
            pl.BlockSpec((C, TN), lambda i, j: (0, j)),
            pl.BlockSpec((1, TN), lambda i, j: (0, j)),
        ],
        out_specs=pl.BlockSpec((TM, TN), lambda i, j: (i, j)),
        compiler_params=_cparams("parallel", "parallel"),
    )(x.reshape(N, C), wl_t, scale_logits)
    return out.reshape(B, T, V)


def ngpt_forward(tokens, emb, params, *, n_heads, dim_head, hidden_dim):
    x = jnp.take(emb, tokens, axis=0)    # TODO(synk): embedding gather in JAX
    for lp in params["layers"]:
        x = attention_block(x, lp["attn"], n_heads=n_heads, dim_head=dim_head)
        x = ffn_block(x, lp["ffn"], hidden_dim)
    return logits_block(x, params["wl_t"], params["scale_logits"])


# --------------------------------------------------------------------------
# Deterministic parameter construction (mirrors the module __init__ shapes)
# --------------------------------------------------------------------------
def row_l2_normalize(w):
    n = jnp.sqrt(jnp.sum(w * w, axis=-1, keepdims=True))
    return w / jnp.maximum(n, EPS)


def init_params(key, *, n_layer, n_embd, n_heads, hidden_dim, vocab_size,
                seq_len):
    dim_head = n_embd // n_heads

    # Global split-half permutation:  new column h*hd2+j       <- old h*dh+2j
    #                                 new column C/2+h*hd2+j   <- old h*dh+2j+1
    evens = np.concatenate([h * dim_head + np.arange(0, dim_head, 2)
                            for h in range(n_heads)])
    odds = np.concatenate([h * dim_head + np.arange(1, dim_head, 2)
                           for h in range(n_heads)])
    perm = np.concatenate([evens, odds]).astype(np.int32)

    inv_freq = 1.0 / (10000.0 ** (np.arange(0, dim_head, 2, dtype=np.float64)
                                  / dim_head))
    ang = np.arange(seq_len, dtype=np.float64)[:, None] * inv_freq[None, :]
    cos = jnp.asarray(np.tile(np.cos(ang), (1, n_heads)), jnp.float32)  # (T,C/2)
    sin = jnp.asarray(np.tile(np.sin(ang), (1, n_heads)), jnp.float32)

    # Scale() modules at init (all evaluate to ones; lerp scale below is not).
    q_scale = jnp.ones((n_embd,), jnp.float32)    # Scale(C, 1, C**-0.5)() == 1
    scale_u = jnp.ones((hidden_dim,), jnp.float32)
    scale_v = jnp.ones((hidden_dim,), jnp.float32)

    layers = []
    lkeys = jax.random.split(key, n_layer)
    for i in range(n_layer):
        ks = jax.random.split(lkeys[i], 7)
        wq = row_l2_normalize(jax.random.normal(ks[0], (n_embd, n_embd), F32))
        wk = row_l2_normalize(jax.random.normal(ks[1], (n_embd, n_embd), F32))
        wv = row_l2_normalize(jax.random.normal(ks[2], (n_embd, n_embd), F32))
        wo = row_l2_normalize(jax.random.normal(ks[3], (n_embd, n_embd), F32))
        w1 = row_l2_normalize(jax.random.normal(ks[4], (hidden_dim, n_embd), F32))
        w3 = row_l2_normalize(jax.random.normal(ks[5], (hidden_dim, n_embd), F32))
        w2 = row_l2_normalize(jax.random.normal(ks[6], (n_embd, hidden_dim), F32))

        # Fold q_scale (the torch module applies it to both q and k) into the
        # projection rows.  Exact here: q_scale() == 1 at init, and any
        # pair-constant diagonal commutes with the rotation.
        wq_s = (wq * q_scale[:, None])[perm, :]
        wk_s = (wk * q_scale[:, None])[perm, :]
        wqkv_t = jnp.concatenate([wq_s.T, wk_s.T, wv.T], axis=1).astype(BF16)

        # Fold scale_u and (scale_v * sqrt(hidden)) into w1/w3, then fuse them.
        w1_t = w1.T * scale_u[None, :]
        w3_t = w3.T * (scale_v * (float(hidden_dim) ** 0.5))[None, :]
        w13_t = jnp.concatenate([w1_t, w3_t], axis=1).astype(BF16)

        lerp = 0.05 / (i + 1)                    # Lerp_Residual scale() at init
        layers.append(dict(
            attn=dict(wqkv_t=wqkv_t, wo_t=wo.T.astype(BF16), cos=cos, sin=sin,
                      lerp_scale=jnp.full((1, n_embd), lerp, F32)),
            ffn=dict(w13_t=w13_t, w2_t=w2.T.astype(BF16),
                     lerp_scale=jnp.full((1, n_embd), lerp, F32)),
        ))

    kl = jax.random.fold_in(key, 123)
    wl = row_l2_normalize(jax.random.normal(kl, (vocab_size, n_embd), F32))
    return dict(layers=layers, wl_t=wl.T.astype(BF16),
                scale_logits=jnp.ones((1, vocab_size), F32))


# --------------------------------------------------------------------------
# Pure-JAX reference (same math & bf16 matmul inputs, no Pallas)
# --------------------------------------------------------------------------
def _ref_attn(x, p, n_heads, dim_head):
    B, T, C = x.shape
    C2 = C // 2
    hd2 = dim_head // 2
    qkv = jnp.einsum("btc,cd->btd", x.astype(BF16), p["wqkv_t"],
                     preferred_element_type=F32)
    q, k, v = qkv[..., :C], qkv[..., C:2 * C], qkv[..., 2 * C:]
    cos, sin = p["cos"], p["sin"]

    def rope(a):
        a1, a2 = a[..., :C2], a[..., C2:]
        return a1 * cos - a2 * sin, a2 * cos + a1 * sin

    def heads(a1, a2):
        a1 = a1.reshape(B, T, n_heads, hd2)
        a2 = a2.reshape(B, T, n_heads, hd2)
        return jnp.concatenate([a1, a2], axis=-1)

    qh = heads(*rope(q)).astype(BF16)
    kh = heads(*rope(k)).astype(BF16)
    vh = v.reshape(B, T, n_heads, dim_head).astype(BF16)

    s = jnp.einsum("bqhd,bkhd->bhqk", qh, kh,
                   preferred_element_type=F32) / (dim_head ** 0.5)
    mask = np.tril(np.ones((T, T), bool))
    s = jnp.where(mask, s, -1e30)
    pa = jax.nn.softmax(s, axis=-1)
    o = jnp.einsum("bhqk,bkhd->bqhd", pa.astype(BF16), vh,
                   preferred_element_type=F32).reshape(B, T, C)
    y = _l2norm(jnp.einsum("btc,cd->btd", o.astype(BF16), p["wo_t"],
                           preferred_element_type=F32))
    out = x + p["lerp_scale"].reshape(1, 1, C) * (y - x)
    return _l2norm(out)


def _ref_ffn(x, p, hidden_dim):
    uv = jnp.einsum("btc,ch->bth", x.astype(BF16), p["w13_t"],
                    preferred_element_type=F32)
    u, v = uv[..., :hidden_dim], uv[..., hidden_dim:]
    g = v * jax.nn.sigmoid(v)
    y = _l2norm(jnp.einsum("bth,hc->btc", (g * u).astype(BF16), p["w2_t"],
                           preferred_element_type=F32))
    out = x + p["lerp_scale"].reshape(1, 1, -1) * (y - x)
    return _l2norm(out)


def ref_forward(tokens, emb, params, *, n_heads, dim_head, hidden_dim):
    x = jnp.take(emb, tokens, axis=0)
    for lp in params["layers"]:
        x = _ref_attn(x, lp["attn"], n_heads, dim_head)
        x = _ref_ffn(x, lp["ffn"], hidden_dim)
    logits = jnp.einsum("btc,cv->btv", x.astype(BF16), params["wl_t"],
                        preferred_element_type=F32)
    return logits * params["scale_logits"].reshape(1, 1, -1)


# --------------------------------------------------------------------------
if __name__ == "__main__":
    # Small nGPT config
    B, T = 2, 16
    n_embd, n_heads, n_layer = 64, 4, 2
    vocab_size, factor = 256, 4
    hidden_dim = factor * n_embd
    dim_head = n_embd // n_heads

    key = jax.random.PRNGKey(0)
    k_emb, k_tok, k_par = jax.random.split(key, 3)

    params = init_params(k_par, n_layer=n_layer, n_embd=n_embd,
                         n_heads=n_heads, hidden_dim=hidden_dim,
                         vocab_size=vocab_size, seq_len=T)
    emb = jax.random.normal(k_emb, (vocab_size, n_embd), jnp.float32)
    tokens = jax.random.randint(k_tok, (B, T), 0, vocab_size)

    fwd = jax.jit(functools.partial(ngpt_forward, n_heads=n_heads,
                                    dim_head=dim_head, hidden_dim=hidden_dim))
    logits = jax.block_until_ready(fwd(tokens, emb, params))

    ref = ref_forward(tokens, emb, params, n_heads=n_heads,
                      dim_head=dim_head, hidden_dim=hidden_dim)
    np.testing.assert_allclose(np.asarray(logits), np.asarray(ref),
                               atol=1e-2, rtol=1e-2)
    print("KERNEL_OK")
</pallas_src>

<mosaic_0001>
module attributes {stable_mosaic.version = 11 : i64} {
  func.func @qkv_rope_kernel(%arg0: i32, %arg1: i32, %arg2: memref<1x16x64xf32, #tpu.memory_space<vmem>>, %arg3: memref<64x192xbf16, #tpu.memory_space<vmem>>, %arg4: memref<16x32xf32, #tpu.memory_space<vmem>>, %arg5: memref<16x32xf32, #tpu.memory_space<vmem>>, %arg6: memref<1x16x64xbf16, #tpu.memory_space<vmem>>, %arg7: memref<1x16x128xbf16, #tpu.memory_space<vmem>>) attributes {dimension_semantics = [#tpu.dimension_semantics<parallel>, #tpu.dimension_semantics<parallel>], iteration_bounds = array<i64: 2, 1>, scalar_prefetch = 0 : i64, scratch_operands = 0 : i64, tpu.core_type = #tpu.core_type<tc>, window_params = [{transform_indices = @transform_0, window_bounds = array<i64: 1, 16, 64>}, {pipeline_mode = #tpu.pipeline_mode<synchronous>, transform_indices = @transform_1, window_bounds = array<i64: 64, 192>}, {transform_indices = @transform_2, window_bounds = array<i64: 16, 32>}, {transform_indices = @transform_3, window_bounds = array<i64: 16, 32>}, {transform_indices = @transform_4, window_bounds = array<i64: 1, 16, 64>}, {transform_indices = @transform_5, window_bounds = array<i64: 1, 16, 128>}]} {
    %c0 = arith.constant 0 : index
    %c0_0 = arith.constant 0 : index
    %c0_1 = arith.constant 0 : index
    %0 = vector.load %arg2[%c0, %c0_0, %c0_1] : memref<1x16x64xf32, #tpu.memory_space<vmem>>, vector<1x16x64xf32>
    %1 = vector.shape_cast %0 : vector<1x16x64xf32> to vector<16x64xf32>
    %2 = arith.truncf %1 : vector<16x64xf32> to vector<16x64xbf16>
    %c0_2 = arith.constant 0 : index
    %c0_3 = arith.constant 0 : index
    %3 = vector.load %arg3[%c0_2, %c0_3] : memref<64x192xbf16, #tpu.memory_space<vmem>>, vector<64x192xbf16>
    %cst = arith.constant dense<0.000000e+00> : vector<16x192xf32>
    %4 = tpu.matmul %2, %3, %cst {dimension_numbers = #tpu.dot_dimension_numbers<[1], [0], [0], [1], [0, 0, 1, 1], [], []>} : vector<16x64xbf16>, vector<64x192xbf16>, vector<16x192xf32> -> vector<16x192xf32>
    %5 = vector.extract_strided_slice %4 {offsets = [0, 0], sizes = [16, 64], strides = [1, 1]} : vector<16x192xf32> to vector<16x64xf32>
    %6 = vector.extract_strided_slice %4 {offsets = [0, 64], sizes = [16, 64], strides = [1, 1]} : vector<16x192xf32> to vector<16x64xf32>
    %7 = vector.extract_strided_slice %4 {offsets = [0, 128], sizes = [16, 64], strides = [1, 1]} : vector<16x192xf32> to vector<16x64xf32>
    %c0_4 = arith.constant 0 : index
    %c0_5 = arith.constant 0 : index
    %8 = vector.load %arg4[%c0_4, %c0_5] : memref<16x32xf32, #tpu.memory_space<vmem>>, vector<16x32xf32>
    %c0_6 = arith.constant 0 : index
    %c0_7 = arith.constant 0 : index
    %9 = vector.load %arg5[%c0_6, %c0_7] : memref<16x32xf32, #tpu.memory_space<vmem>>, vector<16x32xf32>
    %10 = vector.extract_strided_slice %5 {offsets = [0, 0], sizes = [16, 32], strides = [1, 1]} : vector<16x64xf32> to vector<16x32xf32>
    %11 = vector.extract_strided_slice %5 {offsets = [0, 32], sizes = [16, 32], strides = [1, 1]} : vector<16x64xf32> to vector<16x32xf32>
    %12 = vector.extract_strided_slice %6 {offsets = [0, 0], sizes = [16, 32], strides = [1, 1]} : vector<16x64xf32> to vector<16x32xf32>
    %13 = vector.extract_strided_slice %6 {offsets = [0, 32], sizes = [16, 32], strides = [1, 1]} : vector<16x64xf32> to vector<16x32xf32>
    %14 = arith.mulf %10, %8 : vector<16x32xf32>
    %15 = arith.mulf %11, %9 : vector<16x32xf32>
    %16 = arith.subf %14, %15 : vector<16x32xf32>
    %17 = arith.mulf %11, %8 : vector<16x32xf32>
    %18 = arith.mulf %10, %9 : vector<16x32xf32>
    %19 = arith.addf %17, %18 : vector<16x32xf32>
    %20 = arith.mulf %12, %8 : vector<16x32xf32>
    %21 = arith.mulf %13, %9 : vector<16x32xf32>
    %22 = arith.subf %20, %21 : vector<16x32xf32>
    %23 = arith.mulf %13, %8 : vector<16x32xf32>
    %24 = arith.mulf %12, %9 : vector<16x32xf32>
    %25 = arith.addf %23, %24 : vector<16x32xf32>
    %26 = vector.extract_strided_slice %16 {offsets = [0, 0], sizes = [16, 8], strides = [1, 1]} : vector<16x32xf32> to vector<16x8xf32>
    %27 = vector.extract_strided_slice %19 {offsets = [0, 0], sizes = [16, 8], strides = [1, 1]} : vector<16x32xf32> to vector<16x8xf32>
    %28 = vector.extract_strided_slice %16 {offsets = [0, 8], sizes = [16, 8], strides = [1, 1]} : vector<16x32xf32> to vector<16x8xf32>
    %29 = vector.extract_strided_slice %19 {offsets = [0, 8], sizes = [16, 8], strides = [1, 1]} : vector<16x32xf32> to vector<16x8xf32>
    %30 = vector.extract_strided_slice %16 {offsets = [0, 16], sizes = [16, 8], strides = [1, 1]} : vector<16x32xf32> to vector<16x8xf32>
    %31 = vector.extract_strided_slice %19 {offsets = [0, 16], sizes = [16, 8], strides = [1, 1]} : vector<16x32xf32> to vector<16x8xf32>
    %32 = vector.extract_strided_slice %16 {offsets = [0, 24], sizes = [16, 8], strides = [1, 1]} : vector<16x32xf32> to vector<16x8xf32>
    %33 = vector.extract_strided_slice %19 {offsets = [0, 24], sizes = [16, 8], strides = [1, 1]} : vector<16x32xf32> to vector<16x8xf32>
    %34 = tpu.concatenate %26, %27, %28, %29, %30, %31, %32, %33 in 1 : vector<16x8xf32>, vector<16x8xf32>, vector<16x8xf32>, vector<16x8xf32>, vector<16x8xf32>, vector<16x8xf32>, vector<16x8xf32>, vector<16x8xf32> -> vector<16x64xf32>
    %35 = arith.truncf %34 : vector<16x64xf32> to vector<16x64xbf16>
    %c0_8 = arith.constant 0 : index
    %c0_9 = arith.constant 0 : index
    %c0_10 = arith.constant 0 : index
    %36 = vector.load %arg6[%c0_8, %c0_9, %c0_10] : memref<1x16x64xbf16, #tpu.memory_space<vmem>>, vector<1x16x64xbf16>
    %37 = vector.shape_cast %36 : vector<1x16x64xbf16> to vector<16x64xbf16>
    %38 = vector.shape_cast %35 : vector<16x64xbf16> to vector<1x16x64xbf16>
    tpu.vector_store %arg6[%c0_8, %c0_9, %c0_10], %38 {strides = array<i32>} : memref<1x16x64xbf16, #tpu.memory_space<vmem>>, vector<1x16x64xbf16>,
    %39 = vector.extract_strided_slice %22 {offsets = [0, 0], sizes = [16, 8], strides = [1, 1]} : vector<16x32xf32> to vector<16x8xf32>
    %40 = vector.extract_strided_slice %25 {offsets = [0, 0], sizes = [16, 8], strides = [1, 1]} : vector<16x32xf32> to vector<16x8xf32>
    %41 = vector.extract_strided_slice %22 {offsets = [0, 8], sizes = [16, 8], strides = [1, 1]} : vector<16x32xf32> to vector<16x8xf32>
    %42 = vector.extract_strided_slice %25 {offsets = [0, 8], sizes = [16, 8], strides = [1, 1]} : vector<16x32xf32> to vector<16x8xf32>
    %43 = vector.extract_strided_slice %22 {offsets = [0, 16], sizes = [16, 8], strides = [1, 1]} : vector<16x32xf32> to vector<16x8xf32>
    %44 = vector.extract_strided_slice %25 {offsets = [0, 16], sizes = [16, 8], strides = [1, 1]} : vector<16x32xf32> to vector<16x8xf32>
    %45 = vector.extract_strided_slice %22 {offsets = [0, 24], sizes = [16, 8], strides = [1, 1]} : vector<16x32xf32> to vector<16x8xf32>
    %46 = vector.extract_strided_slice %25 {offsets = [0, 24], sizes = [16, 8], strides = [1, 1]} : vector<16x32xf32> to vector<16x8xf32>
    %47 = tpu.concatenate %39, %40, %41, %42, %43, %44, %45, %46 in 1 : vector<16x8xf32>, vector<16x8xf32>, vector<16x8xf32>, vector<16x8xf32>, vector<16x8xf32>, vector<16x8xf32>, vector<16x8xf32>, vector<16x8xf32> -> vector<16x64xf32>
    %48 = tpu.concatenate %47, %7 in 1 : vector<16x64xf32>, vector<16x64xf32> -> vector<16x128xf32>
    %49 = arith.truncf %48 : vector<16x128xf32> to vector<16x128xbf16>
    %c0_11 = arith.constant 0 : index
    %c0_12 = arith.constant 0 : index
    %c0_13 = arith.constant 0 : index
    %50 = vector.load %arg7[%c0_11, %c0_12, %c0_13] : memref<1x16x128xbf16, #tpu.memory_space<vmem>>, vector<1x16x128xbf16>
    %51 = vector.shape_cast %50 : vector<1x16x128xbf16> to vector<16x128xbf16>
    %52 = vector.shape_cast %49 : vector<16x128xbf16> to vector<1x16x128xbf16>
    tpu.vector_store %arg7[%c0_11, %c0_12, %c0_13], %52 {strides = array<i32>} : memref<1x16x128xbf16, #tpu.memory_space<vmem>>, vector<1x16x128xbf16>,
    return
  }
  func.func @transform_0(%arg0: i32, %arg1: i32) -> (i32, i32, i32) {
    %c0_i32 = arith.constant 0 : i32
    %c0_i32_0 = arith.constant 0 : i32
    return %arg0, %arg1, %c0_i32 : i32, i32, i32
  }
  func.func @transform_1(%arg0: i32, %arg1: i32) -> (i32, i32) {
    %c0_i32 = arith.constant 0 : i32
    %c0_i32_0 = arith.constant 0 : i32
    %c0_i32_1 = arith.constant 0 : i32
    return %c0_i32, %c0_i32_0 : i32, i32
  }
  func.func @transform_2(%arg0: i32, %arg1: i32) -> (i32, i32) {
    %c0_i32 = arith.constant 0 : i32
    %c0_i32_0 = arith.constant 0 : i32
    return %arg1, %c0_i32 : i32, i32
  }
  func.func @transform_3(%arg0: i32, %arg1: i32) -> (i32, i32) {
    %c0_i32 = arith.constant 0 : i32
    %c0_i32_0 = arith.constant 0 : i32
    return %arg1, %c0_i32 : i32, i32
  }
  func.func @transform_4(%arg0: i32, %arg1: i32) -> (i32, i32, i32) {
    %c0_i32 = arith.constant 0 : i32
    %c0_i32_0 = arith.constant 0 : i32
    return %arg0, %arg1, %c0_i32 : i32, i32, i32
  }
  func.func @transform_5(%arg0: i32, %arg1: i32) -> (i32, i32, i32) {
    %c0_i32 = arith.constant 0 : i32
    %c0_i32_0 = arith.constant 0 : i32
    return %arg0, %arg1, %c0_i32 : i32, i32, i32
  }
}

module attributes {stable_mosaic.version = 11 : i64} {
  func.func @attn_core_kernel(%arg0: i32, %arg1: i32, %arg2: memref<1x16x64xf32, #tpu.memory_space<vmem>>, %arg3: memref<1x16x64xbf16, #tpu.memory_space<vmem>>, %arg4: memref<1x16x128xbf16, #tpu.memory_space<vmem>>, %arg5: memref<64x64xbf16, #tpu.memory_space<vmem>>, %arg6: memref<1x64xf32, #tpu.memory_space<vmem>>, %arg7: memref<1x16x64xf32, #tpu.memory_space<vmem>>) attributes {dimension_semantics = [#tpu.dimension_semantics<parallel>, #tpu.dimension_semantics<parallel>], iteration_bounds = array<i64: 2, 1>, scalar_prefetch = 0 : i64, scratch_operands = 0 : i64, tpu.core_type = #tpu.core_type<tc>, window_params = [{transform_indices = @transform_0, window_bounds = array<i64: 1, 16, 64>}, {transform_indices = @transform_1, window_bounds = array<i64: 1, 16, 64>}, {transform_indices = @transform_2, window_bounds = array<i64: 1, 16, 128>}, {pipeline_mode = #tpu.pipeline_mode<synchronous>, transform_indices = @transform_3, window_bounds = array<i64: 64, 64>}, {pipeline_mode = #tpu.pipeline_mode<synchronous>, transform_indices = @transform_4, window_bounds = array<i64: 1, 64>}, {transform_indices = @transform_5, window_bounds = array<i64: 1, 16, 64>}]} {
    %c0 = arith.constant 0 : index
    %c0_0 = arith.constant 0 : index
    %c0_1 = arith.constant 0 : index
    %0 = vector.load %arg2[%c0, %c0_0, %c0_1] : memref<1x16x64xf32, #tpu.memory_space<vmem>>, vector<1x16x64xf32>
    %1 = vector.shape_cast %0 : vector<1x16x64xf32> to vector<16x64xf32>
    %c0_2 = arith.constant 0 : index
    %c0_3 = arith.constant 0 : index
    %c0_4 = arith.constant 0 : index
    %2 = vector.load %arg3[%c0_2, %c0_3, %c0_4] : memref<1x16x64xbf16, #tpu.memory_space<vmem>>, vector<1x16x64xbf16>
    %3 = vector.shape_cast %2 : vector<1x16x64xbf16> to vector<16x64xbf16>
    %c0_5 = arith.constant 0 : index
    %c0_6 = arith.constant 0 : index
    %c0_7 = arith.constant 0 : index
    %4 = vector.load %arg4[%c0_5, %c0_6, %c0_7] : memref<1x16x128xbf16, #tpu.memory_space<vmem>>, vector<1x16x128xbf16>
    %5 = vector.shape_cast %4 : vector<1x16x128xbf16> to vector<16x128xbf16>
    %6 = vector.extract_strided_slice %5 {offsets = [0, 0], sizes = [16, 64], strides = [1, 1]} : vector<16x128xbf16> to vector<16x64xbf16>
    %7 = vector.extract_strided_slice %5 {offsets = [0, 64], sizes = [16, 64], strides = [1, 1]} : vector<16x128xbf16> to vector<16x64xbf16>
    %c16_i32 = arith.constant 16 : i32
    %8 = arith.muli %arg1, %c16_i32 : i32
    %9 = tpu.iota {dimensions = array<i32: 0>} : vector<16x16xi32>
    %10 = vector.broadcast %8 : i32 to vector<16x16xi32>
    %11 = arith.addi %9, %10 : vector<16x16xi32>
    %12 = tpu.iota {dimensions = array<i32: 1>} : vector<16x16xi32>
    %13 = arith.cmpi sge, %11, %12 : vector<16x16xi32>
    %14 = vector.extract_strided_slice %3 {offsets = [0, 0], sizes = [16, 16], strides = [1, 1]} : vector<16x64xbf16> to vector<16x16xbf16>
    %15 = vector.extract_strided_slice %6 {offsets = [0, 0], sizes = [16, 16], strides = [1, 1]} : vector<16x64xbf16> to vector<16x16xbf16>
    %cst = arith.constant dense<0.000000e+00> : vector<16x16xf32>
    %16 = tpu.matmul %14, %15, %cst {dimension_numbers = #tpu.dot_dimension_numbers<[1], [1], [0], [0], [0, 0, 1, 0], [], []>} : vector<16x16xbf16>, vector<16x16xbf16>, vector<16x16xf32> -> vector<16x16xf32>
    %cst_8 = arith.constant 2.500000e-01 : f32
    %17 = vector.broadcast %cst_8 : f32 to vector<16x16xf32>
    %18 = arith.mulf %16, %17 : vector<16x16xf32>
    %cst_9 = arith.constant -1.000000e+30 : f32
    %19 = vector.broadcast %cst_9 : f32 to vector<16x16xf32>
    %20 = arith.select %13, %18, %19 : vector<16x16xi1>, vector<16x16xf32>
    %cst_10 = arith.constant dense<0xFF800000> : vector<16xf32>
    %21 = vector.multi_reduction <maximumf>, %20, %cst_10 [1] : vector<16x16xf32> to vector<16xf32>
    %22 = vector.shape_cast %21 : vector<16xf32> to vector<16x1xf32>
    %23 = vector.broadcast %22 : vector<16x1xf32> to vector<16x16xf32>
    %24 = arith.subf %20, %23 : vector<16x16xf32>
    %25 = math.exp %24 : vector<16x16xf32>
    %cst_11 = arith.constant dense<0.000000e+00> : vector<16xf32>
    %26 = vector.multi_reduction <add>, %25, %cst_11 [1] : vector<16x16xf32> to vector<16xf32>
    %27 = vector.shape_cast %26 : vector<16xf32> to vector<16x1xf32>
    %28 = tpu.reciprocal %27 {approx = true} : vector<16x1xf32> -> vector<16x1xf32>
    %29 = vector.broadcast %28 : vector<16x1xf32> to vector<16x16xf32>
    %30 = arith.mulf %25, %29 : vector<16x16xf32>
    %31 = arith.truncf %30 : vector<16x16xf32> to vector<16x16xbf16>
    %32 = vector.extract_strided_slice %7 {offsets = [0, 0], sizes = [16, 16], strides = [1, 1]} : vector<16x64xbf16> to vector<16x16xbf16>
    %cst_12 = arith.constant dense<0.000000e+00> : vector<16x16xf32>
    %33 = tpu.matmul %31, %32, %cst_12 {dimension_numbers = #tpu.dot_dimension_numbers<[1], [0], [0], [1], [0, 0, 1, 1], [], []>} : vector<16x16xbf16>, vector<16x16xbf16>, vector<16x16xf32> -> vector<16x16xf32>
    %34 = vector.extract_strided_slice %3 {offsets = [0, 16], sizes = [16, 16], strides = [1, 1]} : vector<16x64xbf16> to vector<16x16xbf16>
    %35 = vector.extract_strided_slice %6 {offsets = [0, 16], sizes = [16, 16], strides = [1, 1]} : vector<16x64xbf16> to vector<16x16xbf16>
    %cst_13 = arith.constant dense<0.000000e+00> : vector<16x16xf32>
    %36 = tpu.matmul %34, %35, %cst_13 {dimension_numbers = #tpu.dot_dimension_numbers<[1], [1], [0], [0], [0, 0, 1, 0], [], []>} : vector<16x16xbf16>, vector<16x16xbf16>, vector<16x16xf32> -> vector<16x16xf32>
    %cst_14 = arith.constant 2.500000e-01 : f32
    %37 = vector.broadcast %cst_14 : f32 to vector<16x16xf32>
    %38 = arith.mulf %36, %37 : vector<16x16xf32>
    %cst_15 = arith.constant -1.000000e+30 : f32
    %39 = vector.broadcast %cst_15 : f32 to vector<16x16xf32>
    %40 = arith.select %13, %38, %39 : vector<16x16xi1>, vector<16x16xf32>
    %cst_16 = arith.constant dense<0xFF800000> : vector<16xf32>
    %41 = vector.multi_reduction <maximumf>, %40, %cst_16 [1] : vector<16x16xf32> to vector<16xf32>
    %42 = vector.shape_cast %41 : vector<16xf32> to vector<16x1xf32>
    %43 = vector.broadcast %42 : vector<16x1xf32> to vector<16x16xf32>
    %44 = arith.subf %40, %43 : vector<16x16xf32>
    %45 = math.exp %44 : vector<16x16xf32>
    %cst_17 = arith.constant dense<0.000000e+00> : vector<16xf32>
    %46 = vector.multi_reduction <add>, %45, %cst_17 [1] : vector<16x16xf32> to vector<16xf32>
    %47 = vector.shape_cast %46 : vector<16xf32> to vector<16x1xf32>
    %48 = tpu.reciprocal %47 {approx = true} : vector<16x1xf32> -> vector<16x1xf32>
    %49 = vector.broadcast %48 : vector<16x1xf32> to vector<16x16xf32>
    %50 = arith.mulf %45, %49 : vector<16x16xf32>
    %51 = arith.truncf %50 : vector<16x16xf32> to vector<16x16xbf16>
    %52 = vector.extract_strided_slice %7 {offsets = [0, 16], sizes = [16, 16], strides = [1, 1]} : vector<16x64xbf16> to vector<16x16xbf16>
    %cst_18 = arith.constant dense<0.000000e+00> : vector<16x16xf32>
    %53 = tpu.matmul %51, %52, %cst_18 {dimension_numbers = #tpu.dot_dimension_numbers<[1], [0], [0], [1], [0, 0, 1, 1], [], []>} : vector<16x16xbf16>, vector<16x16xbf16>, vector<16x16xf32> -> vector<16x16xf32>
    %54 = vector.extract_strided_slice %3 {offsets = [0, 32], sizes = [16, 16], strides = [1, 1]} : vector<16x64xbf16> to vector<16x16xbf16>
    %55 = vector.extract_strided_slice %6 {offsets = [0, 32], sizes = [16, 16], strides = [1, 1]} : vector<16x64xbf16> to vector<16x16xbf16>
    %cst_19 = arith.constant dense<0.000000e+00> : vector<16x16xf32>
    %56 = tpu.matmul %54, %55, %cst_19 {dimension_numbers = #tpu.dot_dimension_numbers<[1], [1], [0], [0], [0, 0, 1, 0], [], []>} : vector<16x16xbf16>, vector<16x16xbf16>, vector<16x16xf32> -> vector<16x16xf32>
    %cst_20 = arith.constant 2.500000e-01 : f32
    %57 = vector.broadcast %cst_20 : f32 to vector<16x16xf32>
    %58 = arith.mulf %56, %57 : vector<16x16xf32>
    %cst_21 = arith.constant -1.000000e+30 : f32
    %59 = vector.broadcast %cst_21 : f32 to vector<16x16xf32>
    %60 = arith.select %13, %58, %59 : vector<16x16xi1>, vector<16x16xf32>
    %cst_22 = arith.constant dense<0xFF800000> : vector<16xf32>
    %61 = vector.multi_reduction <maximumf>, %60, %cst_22 [1] : vector<16x16xf32> to vector<16xf32>
    %62 = vector.shape_cast %61 : vector<16xf32> to vector<16x1xf32>
    %63 = vector.broadcast %62 : vector<16x1xf32> to vector<16x16xf32>
    %64 = arith.subf %60, %63 : vector<16x16xf32>
    %65 = math.exp %64 : vector<16x16xf32>
    %cst_23 = arith.constant dense<0.000000e+00> : vector<16xf32>
    %66 = vector.multi_reduction <add>, %65, %cst_23 [1] : vector<16x16xf32> to vector<16xf32>
    %67 = vector.shape_cast %66 : vector<16xf32> to vector<16x1xf32>
    %68 = tpu.reciprocal %67 {approx = true} : vector<16x1xf32> -> vector<16x1xf32>
    %69 = vector.broadcast %68 : vector<16x1xf32> to vector<16x16xf32>
    %70 = arith.mulf %65, %69 : vector<16x16xf32>
    %71 = arith.truncf %70 : vector<16x16xf32> to vector<16x16xbf16>
    %72 = vector.extract_strided_slice %7 {offsets = [0, 32], sizes = [16, 16], strides = [1, 1]} : vector<16x64xbf16> to vector<16x16xbf16>
    %cst_24 = arith.constant dense<0.000000e+00> : vector<16x16xf32>
    %73 = tpu.matmul %71, %72, %cst_24 {dimension_numbers = #tpu.dot_dimension_numbers<[1], [0], [0], [1], [0, 0, 1, 1], [], []>} : vector<16x16xbf16>, vector<16x16xbf16>, vector<16x16xf32> -> vector<16x16xf32>
    %74 = vector.extract_strided_slice %3 {offsets = [0, 48], sizes = [16, 16], strides = [1, 1]} : vector<16x64xbf16> to vector<16x16xbf16>
    %75 = vector.extract_strided_slice %6 {offsets = [0, 48], sizes = [16, 16], strides = [1, 1]} : vector<16x64xbf16> to vector<16x16xbf16>
    %cst_25 = arith.constant dense<0.000000e+00> : vector<16x16xf32>
    %76 = tpu.matmul %74, %75, %cst_25 {dimension_numbers = #tpu.dot_dimension_numbers<[1], [1], [0], [0], [0, 0, 1, 0], [], []>} : vector<16x16xbf16>, vector<16x16xbf16>, vector<16x16xf32> -> vector<16x16xf32>
    %cst_26 = arith.constant 2.500000e-01 : f32
    %77 = vector.broadcast %cst_26 : f32 to vector<16x16xf32>
    %78 = arith.mulf %76, %77 : vector<16x16xf32>
    %cst_27 = arith.constant -1.000000e+30 : f32
    %79 = vector.broadcast %cst_27 : f32 to vector<16x16xf32>
    %80 = arith.select %13, %78, %79 : vector<16x16xi1>, vector<16x16xf32>
    %cst_28 = arith.constant dense<0xFF800000> : vector<16xf32>
    %81 = vector.multi_reduction <maximumf>, %80, %cst_28 [1] : vector<16x16xf32> to vector<16xf32>
    %82 = vector.shape_cast %81 : vector<16xf32> to vector<16x1xf32>
    %83 = vector.broadcast %82 : vector<16x1xf32> to vector<16x16xf32>
    %84 = arith.subf %80, %83 : vector<16x16xf32>
    %85 = math.exp %84 : vector<16x16xf32>
    %cst_29 = arith.constant dense<0.000000e+00> : vector<16xf32>
    %86 = vector.multi_reduction <add>, %85, %cst_29 [1] : vector<16x16xf32> to vector<16xf32>
    %87 = vector.shape_cast %86 : vector<16xf32> to vector<16x1xf32>
    %88 = tpu.reciprocal %87 {approx = true} : vector<16x1xf32> -> vector<16x1xf32>
    %89 = vector.broadcast %88 : vector<16x1xf32> to vector<16x16xf32>
    %90 = arith.mulf %85, %89 : vector<16x16xf32>
    %91 = arith.truncf %90 : vector<16x16xf32> to vector<16x16xbf16>
    %92 = vector.extract_strided_slice %7 {offsets = [0, 48], sizes = [16, 16], strides = [1, 1]} : vector<16x64xbf16> to vector<16x16xbf16>
    %cst_30 = arith.constant dense<0.000000e+00> : vector<16x16xf32>
    %93 = tpu.matmul %91, %92, %cst_30 {dimension_numbers = #tpu.dot_dimension_numbers<[1], [0], [0], [1], [0, 0, 1, 1], [], []>} : vector<16x16xbf16>, vector<16x16xbf16>, vector<16x16xf32> -> vector<16x16xf32>
    %94 = tpu.concatenate %33, %53, %73, %93 in 1 : vector<16x16xf32>, vector<16x16xf32>, vector<16x16xf32>, vector<16x16xf32> -> vector<16x64xf32>
    %95 = arith.truncf %94 : vector<16x64xf32> to vector<16x64xbf16>
    %c0_31 = arith.constant 0 : index
    %c0_32 = arith.constant 0 : index
    %96 = vector.load %arg5[%c0_31, %c0_32] : memref<64x64xbf16, #tpu.memory_space<vmem>>, vector<64x64xbf16>
    %cst_33 = arith.constant dense<0.000000e+00> : vector<16x64xf32>
    %97 = tpu.matmul %95, %96, %cst_33 {dimension_numbers = #tpu.dot_dimension_numbers<[1], [0], [0], [1], [0, 0, 1, 1], [], []>} : vector<16x64xbf16>, vector<64x64xbf16>, vector<16x64xf32> -> vector<16x64xf32>
    %98 = arith.mulf %97, %97 : vector<16x64xf32>
    %cst_34 = arith.constant dense<0.000000e+00> : vector<16xf32>
    %99 = vector.multi_reduction <add>, %98, %cst_34 [1] : vector<16x64xf32> to vector<16xf32>
    %100 = vector.shape_cast %99 : vector<16xf32> to vector<16x1xf32>
    %cst_35 = arith.constant 9.99999996E-13 : f32
    %101 = vector.broadcast %cst_35 : f32 to vector<16x1xf32>
    %102 = arith.maximumf %100, %101 : vector<16x1xf32>
    %103 = math.rsqrt %102 : vector<16x1xf32>
    %104 = vector.broadcast %103 : vector<16x1xf32> to vector<16x64xf32>
    %105 = arith.mulf %97, %104 : vector<16x64xf32>
    %c0_36 = arith.constant 0 : index
    %c0_37 = arith.constant 0 : index
    %106 = vector.load %arg6[%c0_36, %c0_37] : memref<1x64xf32, #tpu.memory_space<vmem>>, vector<1x64xf32>
    %107 = arith.subf %105, %1 : vector<16x64xf32>
    %108 = vector.broadcast %106 : vector<1x64xf32> to vector<16x64xf32>
    %109 = arith.mulf %108, %107 : vector<16x64xf32>
    %110 = arith.addf %1, %109 : vector<16x64xf32>
    %111 = arith.mulf %110, %110 : vector<16x64xf32>
    %cst_38 = arith.constant dense<0.000000e+00> : vector<16xf32>
    %112 = vector.multi_reduction <add>, %111, %cst_38 [1] : vector<16x64xf32> to vector<16xf32>
    %113 = vector.shape_cast %112 : vector<16xf32> to vector<16x1xf32>
    %cst_39 = arith.constant 9.99999996E-13 : f32
    %114 = vector.broadcast %cst_39 : f32 to vector<16x1xf32>
    %115 = arith.maximumf %113, %114 : vector<16x1xf32>
    %116 = math.rsqrt %115 : vector<16x1xf32>
    %117 = vector.broadcast %116 : vector<16x1xf32> to vector<16x64xf32>
    %118 = arith.mulf %110, %117 : vector<16x64xf32>
    %c0_40 = arith.constant 0 : index
    %c0_41 = arith.constant 0 : index
    %c0_42 = arith.constant 0 : index
    %119 = vector.load %arg7[%c0_40, %c0_41, %c0_42] : memref<1x16x64xf32, #tpu.memory_space<vmem>>, vector<1x16x64xf32>
    %120 = vector.shape_cast %119 : vector<1x16x64xf32> to vector<16x64xf32>
    %121 = vector.shape_cast %118 : vector<16x64xf32> to vector<1x16x64xf32>
    tpu.vector_store %arg7[%c0_40, %c0_41, %c0_42], %121 {strides = array<i32>} : memref<1x16x64xf32, #tpu.memory_space<vmem>>, vector<1x16x64xf32>,
    return
  }
  func.func @transform_0(%arg0: i32, %arg1: i32) -> (i32, i32, i32) {
    %c0_i32 = arith.constant 0 : i32
    %c0_i32_0 = arith.constant 0 : i32
    return %arg0, %arg1, %c0_i32 : i32, i32, i32
  }
  func.func @transform_1(%arg0: i32, %arg1: i32) -> (i32, i32, i32) {
    %c0_i32 = arith.constant 0 : i32
    %c0_i32_0 = arith.constant 0 : i32
    return %arg0, %arg1, %c0_i32 : i32, i32, i32
  }
  func.func @transform_2(%arg0: i32, %arg1: i32) -> (i32, i32, i32) {
    %c0_i32 = arith.constant 0 : i32
    %c0_i32_0 = arith.constant 0 : i32
    %c0_i32_1 = arith.constant 0 : i32
    return %arg0, %c0_i32, %c0_i32_0 : i32, i32, i32
  }
  func.func @transform_3(%arg0: i32, %arg1: i32) -> (i32, i32) {
    %c0_i32 = arith.constant 0 : i32
    %c0_i32_0 = arith.constant 0 : i32
    %c0_i32_1 = arith.constant 0 : i32
    return %c0_i32, %c0_i32_0 : i32, i32
  }
  func.func @transform_4(%arg0: i32, %arg1: i32) -> (i32, i32) {
    %c0_i32 = arith.constant 0 : i32
    %c0_i32_0 = arith.constant 0 : i32
    %c0_i32_1 = arith.constant 0 : i32
    return %c0_i32, %c0_i32_0 : i32, i32
  }
  func.func @transform_5(%arg0: i32, %arg1: i32) -> (i32, i32, i32) {
    %c0_i32 = arith.constant 0 : i32
    %c0_i32_0 = arith.constant 0 : i32
    return %arg0, %arg1, %c0_i32 : i32, i32, i32
  }
}

module attributes {stable_mosaic.version = 11 : i64} {
  func.func @ffn_kernel(%arg0: i32, %arg1: memref<32x64xf32, #tpu.memory_space<vmem>>, %arg2: memref<64x512xbf16, #tpu.memory_space<vmem>>, %arg3: memref<256x64xbf16, #tpu.memory_space<vmem>>, %arg4: memref<1x64xf32, #tpu.memory_space<vmem>>, %arg5: memref<32x64xf32, #tpu.memory_space<vmem>>) attributes {dimension_semantics = [#tpu.dimension_semantics<parallel>], iteration_bounds = array<i64: 1>, scalar_prefetch = 0 : i64, scratch_operands = 0 : i64, tpu.core_type = #tpu.core_type<tc>, window_params = [{transform_indices = @transform_0, window_bounds = array<i64: 32, 64>}, {pipeline_mode = #tpu.pipeline_mode<synchronous>, transform_indices = @transform_1, window_bounds = array<i64: 64, 512>}, {pipeline_mode = #tpu.pipeline_mode<synchronous>, transform_indices = @transform_2, window_bounds = array<i64: 256, 64>}, {pipeline_mode = #tpu.pipeline_mode<synchronous>, transform_indices = @transform_3, window_bounds = array<i64: 1, 64>}, {transform_indices = @transform_4, window_bounds = array<i64: 32, 64>}]} {
    %c0 = arith.constant 0 : index
    %c0_0 = arith.constant 0 : index
    %0 = vector.load %arg1[%c0, %c0_0] : memref<32x64xf32, #tpu.memory_space<vmem>>, vector<32x64xf32>
    %1 = arith.truncf %0 : vector<32x64xf32> to vector<32x64xbf16>
    %c0_1 = arith.constant 0 : index
    %c0_2 = arith.constant 0 : index
    %2 = vector.load %arg2[%c0_1, %c0_2] : memref<64x512xbf16, #tpu.memory_space<vmem>>, vector<64x512xbf16>
    %cst = arith.constant dense<0.000000e+00> : vector<32x512xf32>
    %3 = tpu.matmul %1, %2, %cst {dimension_numbers = #tpu.dot_dimension_numbers<[1], [0], [0], [1], [0, 0, 1, 1], [], []>} : vector<32x64xbf16>, vector<64x512xbf16>, vector<32x512xf32> -> vector<32x512xf32>
    %4 = vector.extract_strided_slice %3 {offsets = [0, 0], sizes = [32, 256], strides = [1, 1]} : vector<32x512xf32> to vector<32x256xf32>
    %5 = vector.extract_strided_slice %3 {offsets = [0, 256], sizes = [32, 256], strides = [1, 1]} : vector<32x512xf32> to vector<32x256xf32>
    %6 = arith.negf %5 : vector<32x256xf32>
    %7 = math.exp %6 : vector<32x256xf32>
    %cst_3 = arith.constant 1.000000e+00 : f32
    %8 = vector.broadcast %cst_3 : f32 to vector<32x256xf32>
    %9 = arith.addf %8, %7 : vector<32x256xf32>
    %10 = arith.divf %8, %9 : vector<32x256xf32>
    %11 = arith.mulf %5, %10 : vector<32x256xf32>
    %12 = arith.mulf %11, %4 : vector<32x256xf32>
    %13 = arith.truncf %12 : vector<32x256xf32> to vector<32x256xbf16>
    %c0_4 = arith.constant 0 : index
    %c0_5 = arith.constant 0 : index
    %14 = vector.load %arg3[%c0_4, %c0_5] : memref<256x64xbf16, #tpu.memory_space<vmem>>, vector<256x64xbf16>
    %cst_6 = arith.constant dense<0.000000e+00> : vector<32x64xf32>
    %15 = tpu.matmul %13, %14, %cst_6 {dimension_numbers = #tpu.dot_dimension_numbers<[1], [0], [0], [1], [0, 0, 1, 1], [], []>} : vector<32x256xbf16>, vector<256x64xbf16>, vector<32x64xf32> -> vector<32x64xf32>
    %16 = arith.mulf %15, %15 : vector<32x64xf32>
    %cst_7 = arith.constant dense<0.000000e+00> : vector<32xf32>
    %17 = vector.multi_reduction <add>, %16, %cst_7 [1] : vector<32x64xf32> to vector<32xf32>
    %18 = vector.shape_cast %17 : vector<32xf32> to vector<32x1xf32>
    %cst_8 = arith.constant 9.99999996E-13 : f32
    %19 = vector.broadcast %cst_8 : f32 to vector<32x1xf32>
    %20 = arith.maximumf %18, %19 : vector<32x1xf32>
    %21 = math.rsqrt %20 : vector<32x1xf32>
    %22 = vector.broadcast %21 : vector<32x1xf32> to vector<32x64xf32>
    %23 = arith.mulf %15, %22 : vector<32x64xf32>
    %c0_9 = arith.constant 0 : index
    %c0_10 = arith.constant 0 : index
    %24 = vector.load %arg4[%c0_9, %c0_10] : memref<1x64xf32, #tpu.memory_space<vmem>>, vector<1x64xf32>
    %25 = arith.subf %23, %0 : vector<32x64xf32>
    %26 = vector.broadcast %24 : vector<1x64xf32> to vector<32x64xf32>
    %27 = arith.mulf %26, %25 : vector<32x64xf32>
    %28 = arith.addf %0, %27 : vector<32x64xf32>
    %29 = arith.mulf %28, %28 : vector<32x64xf32>
    %cst_11 = arith.constant dense<0.000000e+00> : vector<32xf32>
    %30 = vector.multi_reduction <add>, %29, %cst_11 [1] : vector<32x64xf32> to vector<32xf32>
    %31 = vector.shape_cast %30 : vector<32xf32> to vector<32x1xf32>
    %cst_12 = arith.constant 9.99999996E-13 : f32
    %32 = vector.broadcast %cst_12 : f32 to vector<32x1xf32>
    %33 = arith.maximumf %31, %32 : vector<32x1xf32>
    %34 = math.rsqrt %33 : vector<32x1xf32>
    %35 = vector.broadcast %34 : vector<32x1xf32> to vector<32x64xf32>
    %36 = arith.mulf %28, %35 : vector<32x64xf32>
    %c0_13 = arith.constant 0 : index
    %c0_14 = arith.constant 0 : index
    %37 = vector.load %arg5[%c0_13, %c0_14] : memref<32x64xf32, #tpu.memory_space<vmem>>, vector<32x64xf32>
    tpu.vector_store %arg5[%c0_13, %c0_14], %36 {strides = array<i32>} : memref<32x64xf32, #tpu.memory_space<vmem>>, vector<32x64xf32>,
    return
  }
  func.func @transform_0(%arg0: i32) -> (i32, i32) {
    %c0_i32 = arith.constant 0 : i32
    %c0_i32_0 = arith.constant 0 : i32
    return %arg0, %c0_i32 : i32, i32
  }
  func.func @transform_1(%arg0: i32) -> (i32, i32) {
    %c0_i32 = arith.constant 0 : i32
    %c0_i32_0 = arith.constant 0 : i32
    %c0_i32_1 = arith.constant 0 : i32
    return %c0_i32, %c0_i32_0 : i32, i32
  }
  func.func @transform_2(%arg0: i32) -> (i32, i32) {
    %c0_i32 = arith.constant 0 : i32
    %c0_i32_0 = arith.constant 0 : i32
    %c0_i32_1 = arith.constant 0 : i32
    return %c0_i32, %c0_i32_0 : i32, i32
  }
  func.func @transform_3(%arg0: i32) -> (i32, i32) {
    %c0_i32 = arith.constant 0 : i32
    %c0_i32_0 = arith.constant 0 : i32
    %c0_i32_1 = arith.constant 0 : i32
    return %c0_i32, %c0_i32_0 : i32, i32
  }
  func.func @transform_4(%arg0: i32) -> (i32, i32) {
    %c0_i32 = arith.constant 0 : i32
    %c0_i32_0 = arith.constant 0 : i32
    return %arg0, %c0_i32 : i32, i32
  }
}

module attributes {stable_mosaic.version = 11 : i64} {
  func.func @logits_kernel(%arg0: i32, %arg1: i32, %arg2: memref<32x64xf32, #tpu.memory_space<vmem>>, %arg3: memref<64x256xbf16, #tpu.memory_space<vmem>>, %arg4: memref<1x256xf32, #tpu.memory_space<vmem>>, %arg5: memref<32x256xf32, #tpu.memory_space<vmem>>) attributes {dimension_semantics = [#tpu.dimension_semantics<parallel>, #tpu.dimension_semantics<parallel>], iteration_bounds = array<i64: 1, 1>, scalar_prefetch = 0 : i64, scratch_operands = 0 : i64, tpu.core_type = #tpu.core_type<tc>, window_params = [{transform_indices = @transform_0, window_bounds = array<i64: 32, 64>}, {transform_indices = @transform_1, window_bounds = array<i64: 64, 256>}, {transform_indices = @transform_2, window_bounds = array<i64: 1, 256>}, {transform_indices = @transform_3, window_bounds = array<i64: 32, 256>}]} {
    %c0 = arith.constant 0 : index
    %c0_0 = arith.constant 0 : index
    %0 = vector.load %arg2[%c0, %c0_0] : memref<32x64xf32, #tpu.memory_space<vmem>>, vector<32x64xf32>
    %1 = arith.truncf %0 : vector<32x64xf32> to vector<32x64xbf16>
    %c0_1 = arith.constant 0 : index
    %c0_2 = arith.constant 0 : index
    %2 = vector.load %arg3[%c0_1, %c0_2] : memref<64x256xbf16, #tpu.memory_space<vmem>>, vector<64x256xbf16>
    %cst = arith.constant dense<0.000000e+00> : vector<32x256xf32>
    %3 = tpu.matmul %1, %2, %cst {dimension_numbers = #tpu.dot_dimension_numbers<[1], [0], [0], [1], [0, 0, 1, 1], [], []>} : vector<32x64xbf16>, vector<64x256xbf16>, vector<32x256xf32> -> vector<32x256xf32>
    %c0_3 = arith.constant 0 : index
    %c0_4 = arith.constant 0 : index
    %4 = vector.load %arg4[%c0_3, %c0_4] : memref<1x256xf32, #tpu.memory_space<vmem>>, vector<1x256xf32>
    %5 = vector.broadcast %4 : vector<1x256xf32> to vector<32x256xf32>
    %6 = arith.mulf %3, %5 : vector<32x256xf32>
    %c0_5 = arith.constant 0 : index
    %c0_6 = arith.constant 0 : index
    %7 = vector.load %arg5[%c0_5, %c0_6] : memref<32x256xf32, #tpu.memory_space<vmem>>, vector<32x256xf32>
    tpu.vector_store %arg5[%c0_5, %c0_6], %6 {strides = array<i32>} : memref<32x256xf32, #tpu.memory_space<vmem>>, vector<32x256xf32>,
    return
  }
  func.func @transform_0(%arg0: i32, %arg1: i32) -> (i32, i32) {
    %c0_i32 = arith.constant 0 : i32
    %c0_i32_0 = arith.constant 0 : i32
    return %arg0, %c0_i32 : i32, i32
  }
  func.func @transform_1(%arg0: i32, %arg1: i32) -> (i32, i32) {
    %c0_i32 = arith.constant 0 : i32
    %c0_i32_0 = arith.constant 0 : i32
    return %c0_i32, %arg1 : i32, i32
  }
  func.func @transform_2(%arg0: i32, %arg1: i32) -> (i32, i32) {
    %c0_i32 = arith.constant 0 : i32
    %c0_i32_0 = arith.constant 0 : i32
    return %c0_i32, %arg1 : i32, i32
  }
  func.func @transform_3(%arg0: i32, %arg1: i32) -> (i32, i32) {
    %c0_i32 = arith.constant 0 : i32
    return %arg0, %arg1 : i32, i32
  }
}

</mosaic_0001>

<llo_original>
// kernel: ngpt_forward.7
$region0: #{ngpt_forward.7}
  #allocation0 [shape = 'u32[]', space=smem, size = 0x4, offset = 0x4, fixed_abs, tag = 'smem constant byte address 0x4 - core index']
  #allocation1 [shape = 'u32[144,128]{1,0:T(1,128)}', space=vmem, size = 0x12000, scoped, tag = 'internal scratch']
  %s0 = inlined_call_operand.vmem [shape: f32[2,16,64], index: 0, kind: input, shape index: {}]
  %s1 = inlined_call_operand.vmem [shape: bf16[64,192], index: 1, kind: input, shape index: {}]
  %s2 = inlined_call_operand.vmem [shape: f32[16,32], index: 2, kind: input, shape index: {}]
  %s3 = inlined_call_operand.vmem [shape: f32[16,32], index: 3, kind: input, shape index: {}]
  %s4 = inlined_call_operand.vmem [shape: bf16[2,16,64], index: 4, kind: output, shape index: {0}]
  %s5 = inlined_call_operand.vmem [shape: bf16[2,16,128], index: 5, kind: output, shape index: {1}]
  %6 = xla_tuple %s4, %s5
  %s7 = sld [smem:[#allocation0]]
  $region57: #{ngpt_forward.7} parent=0
    _
  %s9 = ssub.s32 1, %s7
  %s10 = scalar_select 0, %s9, %s7
  loop: start=0, step=1, limit=4
  $region2: #{ngpt_forward.7} parent=0 // loop_pre_header
    _
  $region3: #{ngpt_forward.7} parent=0 // loop_header
    %s12 = sphi 0, %s16
    %p13 = scmp.ge.s32.totalorder %s12, 4
    %s19 = sphi 0, %s31
    %s20 = sphi 0, %s27
    %s21 = sphi 0, %s19
    %s22 = sphi 0, %s20
    %s23 = sphi 0, %s21
    %s24 = sphi 0, %s22
    %s36 = sphi 0, %s38
    %s39 = sphi 0, %s36
    %s40 = sphi 0, %s39
    %s56 = sphi 0, %s40
    %s60 = sphi 0, %s60
    %s62 = sphi 0, %s60
    %s63 = sphi 0, %s62
    %s77 = sphi 0, %s63
    %s83 = sphi 0, %s85
    %s86 = sphi 0, %s83
    %s87 = sphi 0, %s86
    %s103 = sphi 0, %s87
    %s109 = sphi 0, %s111
    %s112 = sphi 0, %s109
    %s113 = sphi 0, %s112
    %s129 = sphi 0, %s113
    %s137 = sphi 0, %s139
    %s140 = sphi 0, %s137
    %s141 = sphi 0, %s140
    %s157 = sphi 0, %s141
    %s165 = sphi 0, %s167
    %s168 = sphi 0, %s165
    %s169 = sphi 0, %s168
    %s185 = sphi 0, %s169
  $region4: #{ngpt_forward.7} parent=0 // loop_header_branch
    %15 = sbr.rel (%p13) target = $region8
  $region5: #{ngpt_forward.7} parent=0 // loop_body
    %s17 = ssub.s32 %s12, 1
    %s18 = ssub.s32 %s12, 2
    %s25 = sadd.s32 1, %s20
    %p26 = scmp.ge.s32.totalorder %s25, 1
    %s27 = scalar_select %p26, 0, %s25
    %s28 = sadd.s32 1, %s19
    %s29 = scalar_select %p26, %s28, %s19
    %p30 = scmp.ge.s32.totalorder %s29, 2
    %s31 = scalar_select %p30, 0, %s29
    %s32 = ssub.s32 %s19, %s31
    %s33 = ssub.s32 %s20, %s27
    %s34 = sor.u32 %s32, %s33
    %p35 = scmp.eq.s32.totalorder %s34, 0
    %s37 = sadd.s32 %s36, 1
    %s38 = scalar_select %p35, %s36, %s37
    %p41 = pneg %p35
    %p42 = scmp.eq.s32.totalorder %s12, 1
    %p43 = por %p41, %p42
    %p44 = scmp.ne.s32.totalorder %s36, %s39
    %p45 = scmp.eq.s32.totalorder %s12, 0
    %p46 = por %p44, %p45
    %p47 = scmp.ne.s32.totalorder %s36, %s39
    %p48 = scmp.eq.s32.totalorder %s17, 1
    %p49 = por %p47, %p48
    %p50 = scmp.ne.s32.totalorder %s39, %s40
    %p51 = scmp.eq.s32.totalorder %s17, 0
    %p52 = por %p50, %p51
    %p53 = scmp.ne.s32.totalorder %s39, %s40
    %p54 = scmp.eq.s32.totalorder %s18, 1
    %p55 = por %p53, %p54
    %p57 = scmp.ne.s32.totalorder %s40, %s56
    %p58 = scmp.eq.s32.totalorder %s18, 0
    %p59 = por %p57, %p58
    %s61 = sadd.s32 %s60, 1
    %p64 = scmp.eq.s32.totalorder %s12, 1
    %p65 = scmp.ne.s32.totalorder %s60, %s62
    %p66 = scmp.eq.s32.totalorder %s12, 0
    %p67 = por %p65, %p66
    %p68 = scmp.ne.s32.totalorder %s60, %s62
    %p69 = scmp.eq.s32.totalorder %s17, 1
    %p70 = por %p68, %p69
    %p71 = scmp.ne.s32.totalorder %s62, %s63
    %p72 = scmp.eq.s32.totalorder %s17, 0
    %p73 = por %p71, %p72
    %p74 = scmp.ne.s32.totalorder %s62, %s63
    %p75 = scmp.eq.s32.totalorder %s18, 1
    %p76 = por %p74, %p75
    %p78 = scmp.ne.s32.totalorder %s63, %s77
    %p79 = scmp.eq.s32.totalorder %s18, 0
    %p80 = por %p78, %p79
    %s81 = ssub.s32 %s20, %s27
    %p82 = scmp.eq.s32.totalorder %s81, 0
    %s84 = sadd.s32 %s83, 1
    %s85 = scalar_select %p82, %s83, %s84
    %p88 = pneg %p82
    %p89 = scmp.eq.s32.totalorder %s12, 1
    %p90 = por %p88, %p89
    %p91 = scmp.ne.s32.totalorder %s83, %s86
    %p92 = scmp.eq.s32.totalorder %s12, 0
    %p93 = por %p91, %p92
    %p94 = scmp.ne.s32.totalorder %s83, %s86
    %p95 = scmp.eq.s32.totalorder %s17, 1
    %p96 = por %p94, %p95
    %p97 = scmp.ne.s32.totalorder %s86, %s87
    %p98 = scmp.eq.s32.totalorder %s17, 0
    %p99 = por %p97, %p98
    %p100 = scmp.ne.s32.totalorder %s86, %s87
    %p101 = scmp.eq.s32.totalorder %s18, 1
    %p102 = por %p100, %p101
    %p104 = scmp.ne.s32.totalorder %s87, %s103
    %p105 = scmp.eq.s32.totalorder %s18, 0
    %p106 = por %p104, %p105
    %s107 = ssub.s32 %s20, %s27
    %p108 = scmp.eq.s32.totalorder %s107, 0
    %s110 = sadd.s32 %s109, 1
    %s111 = scalar_select %p108, %s109, %s110
    %p114 = pneg %p108
    %p115 = scmp.eq.s32.totalorder %s12, 1
    %p116 = por %p114, %p115
    %p117 = scmp.ne.s32.totalorder %s109, %s112
    %p118 = scmp.eq.s32.totalorder %s12, 0
    %p119 = por %p117, %p118
    %p120 = scmp.ne.s32.totalorder %s109, %s112
    %p121 = scmp.eq.s32.totalorder %s17, 1
    %p122 = por %p120, %p121
    %p123 = scmp.ne.s32.totalorder %s112, %s113
    %p124 = scmp.eq.s32.totalorder %s17, 0
    %p125 = por %p123, %p124
    %p126 = scmp.ne.s32.totalorder %s112, %s113
    %p127 = scmp.eq.s32.totalorder %s18, 1
    %p128 = por %p126, %p127
    %p130 = scmp.ne.s32.totalorder %s113, %s129
    %p131 = scmp.eq.s32.totalorder %s18, 0
    %p132 = por %p130, %p131
    %s133 = ssub.s32 %s19, %s31
    %s134 = ssub.s32 %s20, %s27
    %s135 = sor.u32 %s133, %s134
    %p136 = scmp.eq.s32.totalorder %s135, 0
    %s138 = sadd.s32 %s137, 1
    %s139 = scalar_select %p136, %s137, %s138
    %p142 = pneg %p136
    %p143 = scmp.eq.s32.totalorder %s12, 1
    %p144 = por %p142, %p143
    %p145 = scmp.ne.s32.totalorder %s137, %s140
    %p146 = scmp.eq.s32.totalorder %s12, 0
    %p147 = por %p145, %p146
    %p148 = scmp.ne.s32.totalorder %s137, %s140
    %p149 = scmp.eq.s32.totalorder %s17, 1
    %p150 = por %p148, %p149
    %p151 = scmp.ne.s32.totalorder %s140, %s141
    %p152 = scmp.eq.s32.totalorder %s17, 0
    %p153 = por %p151, %p152
    %p154 = scmp.ne.s32.totalorder %s140, %s141
    %p155 = scmp.eq.s32.totalorder %s18, 1
    %p156 = por %p154, %p155
    %p158 = scmp.ne.s32.totalorder %s141, %s157
    %p159 = scmp.eq.s32.totalorder %s18, 0
    %p160 = por %p158, %p159
    %s161 = ssub.s32 %s19, %s31
    %s162 = ssub.s32 %s20, %s27
    %s163 = sor.u32 %s161, %s162
    %p164 = scmp.eq.s32.totalorder %s163, 0
    %s166 = sadd.s32 %s165, 1
    %s167 = scalar_select %p164, %s165, %s166
    %p170 = pneg %p164
    %p171 = scmp.eq.s32.totalorder %s12, 1
    %p172 = por %p170, %p171
    %p173 = scmp.ne.s32.totalorder %s165, %s168
    %p174 = scmp.eq.s32.totalorder %s12, 0
    %p175 = por %p173, %p174
    %p176 = scmp.ne.s32.totalorder %s165, %s168
    %p177 = scmp.eq.s32.totalorder %s17, 1
    %p178 = por %p176, %p177
    %p179 = scmp.ne.s32.totalorder %s168, %s169
    %p180 = scmp.eq.s32.totalorder %s17, 0
    %p181 = por %p179, %p180
    %p182 = scmp.ne.s32.totalorder %s168, %s169
    %p183 = scmp.eq.s32.totalorder %s18, 1
    %p184 = por %p182, %p183
    %p186 = scmp.ne.s32.totalorder %s169, %s185
    %p187 = scmp.eq.s32.totalorder %s18, 0
    %p188 = por %p186, %p187
    %p189 = scmp.le.s32.totalorder 1, %s12
    %p190 = scmp.lt.s32.totalorder %s12, 3
    %p191 = pnand %p189, %p190
    %p192 = pneg %p191
    // Predicated region
    $region9: #{ngpt_forward.7} parent=5 // pred_check
      _
    $region10: #{ngpt_forward.7} parent=5 // pred_check_branch
      %194 = sbr.rel (%p191) target = $region12
    $region11: #{ngpt_forward.7} parent=5 // pred_region
      %s195 = ssub.s32 %s12, 1
      // Predicated region
      $region13: #{ngpt_forward.7} parent=11 // pred_check
        %p196 = pneg %p73
      $region14: #{ngpt_forward.7} parent=11 // pred_check_branch
        %198 = sbr.rel (%p196) target = $region16
      $region15: #{ngpt_forward.7} parent=11 // pred_region
        _
      $region16: #{ngpt_forward.7} parent=11 // pred_fallthru
        _
      // Predicated region
      $region17: #{ngpt_forward.7} parent=11 // pred_check
        %p199 = pneg %p99
      $region18: #{ngpt_forward.7} parent=11 // pred_check_branch
        %201 = sbr.rel (%p199) target = $region20
      $region19: #{ngpt_forward.7} parent=11 // pred_region
        %s202 = smul.u32 2, %s22
        %p203 = scmp.lt.s32.totalorder %s202, 1
        %s204 = scalar_select %p203, %s202, 1
        %s205 = smul.addr %s204, 8
        %s206 = scalar_lea.vmem %s2, %s205
        %s207 = smul.u32 2, %s22
      $region20: #{ngpt_forward.7} parent=11 // pred_fallthru
        _
      // Predicated region
      $region21: #{ngpt_forward.7} parent=11 // pred_check
        %p208 = pneg %p125
      $region22: #{ngpt_forward.7} parent=11 // pred_check_branch
        %210 = sbr.rel (%p208) target = $region24
      $region23: #{ngpt_forward.7} parent=11 // pred_region
        %s211 = smul.u32 2, %s22
        %p212 = scmp.lt.s32.totalorder %s211, 1
        %s213 = scalar_select %p212, %s211, 1
        %s214 = smul.addr %s213, 8
        %s215 = scalar_lea.vmem %s3, %s214
        %s216 = smul.u32 2, %s22
      $region24: #{ngpt_forward.7} parent=11 // pred_fallthru
        _
    $region12: #{ngpt_forward.7} parent=5 // pred_fallthru
      _
    %p217 = scmp.lt.s32.totalorder %s12, 2
    // Predicated region
    $region25: #{ngpt_forward.7} parent=5 // pred_check
      %p218 = pneg %p217
    $region26: #{ngpt_forward.7} parent=5 // pred_check_branch
      %220 = sbr.rel (%p218) target = $region28
    $region27: #{ngpt_forward.7} parent=5 // pred_region
      // Predicated region
      $region29: #{ngpt_forward.7} parent=27 // pred_check
        %p221 = pneg %p46
      $region30: #{ngpt_forward.7} parent=27 // pred_check_branch
        %223 = sbr.rel (%p221) target = $region32
      $region31: #{ngpt_forward.7} parent=27 // pred_region
        %s224 = smul.u32 2, %s20
        %p225 = scmp.lt.s32.totalorder %s19, 1
        %s226 = scalar_select %p225, %s19, 1
        %p227 = scmp.lt.s32.totalorder %s224, 1
        %s228 = scalar_select %p227, %s224, 1
        %s229 = smul.addr %s226, 2
        %s230 = sadd.s32 %s228, %s229
        %s231 = smul.addr %s230, 8
        %s232 = scalar_lea.vmem %s0, %s231
        %s233 = smul.u32 2, %s20
      $region32: #{ngpt_forward.7} parent=27 // pred_fallthru
        _
    $region28: #{ngpt_forward.7} parent=5 // pred_fallthru
      _
    %p234 = scmp.le.s32.totalorder 1, %s12
    %p235 = scmp.lt.s32.totalorder %s12, 3
    %p236 = pnand %p234, %p235
    %p237 = pneg %p236
    // Predicated region
    $region33: #{ngpt_forward.7} parent=5 // pred_check
      _
    $region34: #{ngpt_forward.7} parent=5 // pred_check_branch
      %239 = sbr.rel (%p236) target = $region36
    $region35: #{ngpt_forward.7} parent=5 // pred_region
      %s240 = ssub.s32 %s12, 1
      %s241 = smul.u32 2, %s22
      %p242 = scmp.lt.s32.totalorder %s21, 1
      %s243 = scalar_select %p242, %s21, 1
      %p244 = scmp.lt.s32.totalorder %s241, 1
      %s245 = scalar_select %p244, %s241, 1
      %s246 = smul.addr %s243, 2
      %s247 = sadd.s32 %s245, %s246
      %s248 = smul.addr %s247, 8
      %s249 = scalar_lea.vmem %s0, %s248
      %p250 = pneg %p52
      %p251 = pneg %p49
      %p252 = pneg %p73
      %p253 = pneg %p70
      %s254 = smul.u32 2, %s22
      %p255 = scmp.lt.s32.totalorder %s254, 1
      %s256 = scalar_select %p255, %s254, 1
      %s257 = smul.addr %s256, 8
      %s258 = scalar_lea.vmem %s2, %s257
      %p259 = pneg %p99
      %p260 = pneg %p96
      %s261 = smul.u32 2, %s22
      %p262 = scmp.lt.s32.totalorder %s261, 1
      %s263 = scalar_select %p262, %s261, 1
      %s264 = smul.addr %s263, 8
      %s265 = scalar_lea.vmem %s3, %s264
      %p266 = pneg %p125
      %p267 = pneg %p122
      %p268 = pneg %p153
      %p269 = pneg %p150
      %s270 = smul.u32 2, %s22
      %p271 = scmp.lt.s32.totalorder %s21, 1
      %s272 = scalar_select %p271, %s21, 1
      %p273 = scmp.lt.s32.totalorder %s270, 1
      %s274 = scalar_select %p273, %s270, 1
      %s275 = smul.addr %s272, 2
      %s276 = sadd.s32 %s274, %s275
      %s277 = smul.addr %s276, 4
      %s278 = scalar_lea.vmem %s4, %s277
      %p279 = pneg %p181
      %p280 = pneg %p178
      %s281 = smul.u32 2, %s22
      %p282 = scmp.lt.s32.totalorder %s21, 1
      %s283 = scalar_select %p282, %s21, 1
      %p284 = scmp.lt.s32.totalorder %s281, 1
      %s285 = scalar_select %p284, %s281, 1
      %s286 = smul.addr %s283, 2
      %s287 = sadd.s32 %s285, %s286
      %s288 = smul.addr %s287, 4
      %s289 = scalar_lea.vmem %s5, %s288
      %s290 = smul.u32 2, %s22
      %p291 = scmp.lt.s32.totalorder %s21, 1
      %s292 = scalar_select %p291, %s21, 1
      %p293 = scmp.lt.s32.totalorder %s290, 1
      %s294 = scalar_select %p293, %s290, 1
      %s295 = smul.addr %s292, 2
      %s296 = sadd.s32 %s294, %s295
      %s297 = smul.addr %s296, 8
      %s298 = scalar_lea.vmem %s0, %s297
      %s299 = smul.u32 2, %s22
      %s300 = smul.u32 2, %s22
      %p301 = scmp.lt.s32.totalorder %s300, 1
      %s302 = scalar_select %p301, %s300, 1
      %s303 = smul.addr %s302, 8
      %s304 = scalar_lea.vmem %s2, %s303
      %s305 = smul.u32 2, %s22
      %s306 = smul.u32 2, %s22
      %p307 = scmp.lt.s32.totalorder %s306, 1
      %s308 = scalar_select %p307, %s306, 1
      %s309 = smul.addr %s308, 8
      %s310 = scalar_lea.vmem %s3, %s309
      %s311 = smul.u32 2, %s22
      %s312 = smul.u32 2, %s22
      %p313 = scmp.lt.s32.totalorder %s21, 1
      %s314 = scalar_select %p313, %s21, 1
      %p315 = scmp.lt.s32.totalorder %s312, 1
      %s316 = scalar_select %p315, %s312, 1
      %s317 = smul.addr %s314, 2
      %s318 = sadd.s32 %s316, %s317
      %s319 = smul.addr %s318, 4
      %s320 = scalar_lea.vmem %s4, %s319
      %s321 = smul.u32 2, %s22
      %s322 = smul.u32 2, %s22
      %p323 = scmp.lt.s32.totalorder %s21, 1
      %s324 = scalar_select %p323, %s21, 1
      %p325 = scmp.lt.s32.totalorder %s322, 1
      %s326 = scalar_select %p325, %s322, 1
      %s327 = smul.addr %s324, 2
      %s328 = sadd.s32 %s326, %s327
      %s329 = smul.addr %s328, 4
      %s330 = scalar_lea.vmem %s5, %s329
      %s331 = smul.u32 2, %s22
      %v333 = vld [vmem:[%s298] sm:$0xff]
      %v334 = vld [vmem:[%s298 + $0x8] sm:$0xff]
      %v335 = vpack.c.bf16 %v334, %v333
      %v336 = vld [vmem:[%s1] sm:$0xff]
      %v337 = vld [vmem:[%s1 + $0x8] sm:$0xff]
      %v338 = vld [vmem:[%s1 + $0x10] sm:$0xff]
      %v339 = vld [vmem:[%s1 + $0x18] sm:$0xff]
      %v340 = vld [vmem:[%s1 + $0x20] sm:$0xff]
      %v341 = vld [vmem:[%s1 + $0x28] sm:$0xff]
      %v342 = vld [vmem:[%s1 + $0x30] sm:$0xff]
      %v343 = vld [vmem:[%s1 + $0x38] sm:$0xff]
      %v352 = vunpack.c.l.b16 %v336
      %v353 = vunpack.c.h.b16 %v336
      %v354 = vunpack.c.l.b16 %v337
      %v355 = vunpack.c.h.b16 %v337
      %v356 = vunpack.c.l.b16 %v338
      %v357 = vunpack.c.h.b16 %v338
      %v358 = vunpack.c.l.b16 %v339
      %v359 = vunpack.c.h.b16 %v339
      %v360 = vunpack.c.l.b16 %v340
      %v361 = vunpack.c.h.b16 %v340
      %v362 = vunpack.c.l.b16 %v341
      %v363 = vunpack.c.h.b16 %v341
      %v364 = vunpack.c.l.b16 %v342
      %v365 = vunpack.c.h.b16 %v342
      %v366 = vunpack.c.l.b16 %v343
      %v367 = vunpack.c.h.b16 %v343
      %v368 = vpack.c.b16 %v354, %v352
      %v369 = vpack.c.b16 %v355, %v353
      %v370 = vpack.c.b16 %v358, %v356
      %v371 = vpack.c.b16 %v359, %v357
      %v372 = vpack.c.b16 %v362, %v360
      %v373 = vpack.c.b16 %v363, %v361
      %v374 = vpack.c.b16 %v366, %v364
      %v375 = vpack.c.b16 %v367, %v365
      %vm384 = vcmask 523264
      %v386 = vsel %vm384, %v335, 0
      %388 = vmatprep.subr.bf16.mxu0 %v369
      %389 = vmatpush1.bf16.msra.mxu0 %v368
      %390 = vmatprep.subr.bf16.mxu0 %v371
      %391 = vmatpush1.bf16.msra.mxu0 %v370
      %392 = vmatprep.subr.bf16.mxu0 %v373
      %393 = vmatpush1.bf16.msra.mxu0 %v372
      %394 = vmatprep.subr.bf16.mxu0 %v375
      %395 = vmatpush1.bf16.msra.mxu0 %v374
      %396 = vmatprep.subr.bf16.mxu0 0
      %397 = vmatpush1.bf16.msra.mxu0 0
      %398 = vmatprep.subr.bf16.mxu0 0
      %399 = vmatpush1.bf16.msra.mxu0 0
      %400 = vmatprep.subr.bf16.mxu0 0
      %401 = vmatpush1.bf16.msra.mxu0 0
      %402 = vmatprep.subr.bf16.mxu0 0
      %403 = vmatpush1.bf16.msra.mxu0 0
      %404 = vmatprep.subr.bf16.mxu0 0
      %405 = vmatpush1.bf16.msra.mxu0 0
      %406 = vmatprep.subr.bf16.mxu0 0
      %407 = vmatpush1.bf16.msra.mxu0 0
      %408 = vmatprep.subr.bf16.mxu0 0
      %409 = vmatpush1.bf16.msra.mxu0 0
      %410 = vmatprep.subr.bf16.mxu0 0
      %411 = vmatpush1.bf16.msra.mxu0 0
      %412 = vmatprep.subr.bf16.mxu0 0
      %413 = vmatpush1.bf16.msra.mxu0 0
      %414 = vmatprep.subr.bf16.mxu0 0
      %415 = vmatpush1.bf16.msra.mxu0 0
      %416 = vmatprep.subr.bf16.mxu0 0
      %417 = vmatpush1.bf16.msra.mxu0 0
      %418 = vmatprep.subr.bf16.mxu0 0
      %419 = vmatpush1.bf16.msra.mxu0 0
      %420 = vmatprep.mubr.bf16.mxu0 0
      %421 = vmatmul.mubr.bf16.gmra.mrb[0].mxu0 %v386
      %v422 = vpop.f32.mrb[0].mxu0
      %v423 = vadd.f32 0.0, %v422
      %v424 = vpop.f32.mrb[0].mxu0
      %v425 = vadd.f32 0.0, %v424
      %v426 = vpop.f32.mrb[0].mxu0
      %v427 = vadd.f32 0.0, %v426
      %v428 = vpop.f32.mrb[0].mxu0
      %v429 = vadd.f32 0.0, %v428
      %430 = vdwg.mxu0
      %v431 = vld [vmem:[%s304] sm:$0xff]
      %v432 = vld [vmem:[%s304 + $0x8] sm:$0xff]
      %v433 = vld [vmem:[%s310] sm:$0xff]
      %v434 = vld [vmem:[%s310 + $0x8] sm:$0xff]
      %v435 = vmul.f32 %v423, %v431
      %v436 = vmul.f32 %v427, %v432
      %439 = vrot.lane.b32.xlu0 %v433, 32
      %v440 = vpop.permute.xlu0 %439
      %441 = vrot.lane.b32.xlu0 %v434, 32
      %v442 = vpop.permute.xlu0 %441
      %v445 = vmul.f32 %v423, %v440
      %v446 = vmul.f32 %v427, %v442
      %449 = vrot.lane.b32.xlu0 %v445, 96
      %v450 = vpop.permute.xlu0 %449
      %451 = vrot.lane.b32.xlu0 %v446, 96
      %v452 = vpop.permute.xlu0 %451
      %v455 = vsub.f32 %v435, %v450
      %v456 = vsub.f32 %v436, %v452
      %459 = vrot.lane.b32.xlu0 %v431, 32
      %v460 = vpop.permute.xlu0 %459
      %461 = vrot.lane.b32.xlu0 %v432, 32
      %v462 = vpop.permute.xlu0 %461
      %v465 = vmul.f32 %v423, %v460
      %v466 = vmul.f32 %v427, %v462
      %v467 = vmul.f32 %v423, %v433
      %v468 = vmul.f32 %v427, %v434
      %471 = vrot.lane.b32.xlu0 %v467, 32
      %v472 = vpop.permute.xlu0 %471
      %473 = vrot.lane.b32.xlu0 %v468, 32
      %v474 = vpop.permute.xlu0 %473
      %v477 = vadd.f32 %v465, %v472
      %v478 = vadd.f32 %v466, %v474
      %479 = vrot.lane.b32.xlu0 %v431, 64
      %v480 = vpop.permute.xlu0 %479
      %481 = vrot.lane.b32.xlu0 %v432, 64
      %v482 = vpop.permute.xlu0 %481
      %v485 = vmul.f32 %v423, %v480
      %v486 = vmul.f32 %v427, %v482
      %487 = vrot.lane.b32.xlu0 %v433, 96
      %v488 = vpop.permute.xlu0 %487
      %489 = vrot.lane.b32.xlu0 %v434, 96
      %v490 = vpop.permute.xlu0 %489
      %v493 = vmul.f32 %v423, %v488
      %v494 = vmul.f32 %v427, %v490
      %497 = vrot.lane.b32.xlu0 %v493, 96
      %v498 = vpop.permute.xlu0 %497
      %499 = vrot.lane.b32.xlu0 %v494, 96
      %v500 = vpop.permute.xlu0 %499
      %v503 = vsub.f32 %v485, %v498
      %v504 = vsub.f32 %v486, %v500
      %505 = vrot.lane.b32.xlu0 %v431, 96
      %v506 = vpop.permute.xlu0 %505
      %507 = vrot.lane.b32.xlu0 %v432, 96
      %v508 = vpop.permute.xlu0 %507
      %v511 = vmul.f32 %v423, %v506
      %v512 = vmul.f32 %v427, %v508
      %513 = vrot.lane.b32.xlu0 %v433, 64
      %v514 = vpop.permute.xlu0 %513
      %515 = vrot.lane.b32.xlu0 %v434, 64
      %v516 = vpop.permute.xlu0 %515
      %v519 = vmul.f32 %v423, %v514
      %v520 = vmul.f32 %v427, %v516
      %523 = vrot.lane.b32.xlu0 %v519, 32
      %v524 = vpop.permute.xlu0 %523
      %525 = vrot.lane.b32.xlu0 %v520, 32
      %v526 = vpop.permute.xlu0 %525
      %v529 = vadd.f32 %v511, %v524
      %v530 = vadd.f32 %v512, %v526
      %533 = vrot.lane.b32.xlu0 %v477, 104
      %v534 = vpop.permute.xlu0 %533
      %535 = vrot.lane.b32.xlu0 %v478, 104
      %v536 = vpop.permute.xlu0 %535
      %541 = vrot.lane.b32.xlu0 %v455, 8
      %v542 = vpop.permute.xlu0 %541
      %543 = vrot.lane.b32.xlu0 %v456, 8
      %v544 = vpop.permute.xlu0 %543
      %547 = vrot.lane.b32.xlu0 %v477, 112
      %v548 = vpop.permute.xlu0 %547
      %549 = vrot.lane.b32.xlu0 %v478, 112
      %v550 = vpop.permute.xlu0 %549
      %553 = vrot.lane.b32.xlu0 %v455, 16
      %v554 = vpop.permute.xlu0 %553
      %555 = vrot.lane.b32.xlu0 %v456, 16
      %v556 = vpop.permute.xlu0 %555
      %559 = vrot.lane.b32.xlu0 %v477, 120
      %v560 = vpop.permute.xlu0 %559
      %561 = vrot.lane.b32.xlu0 %v478, 120
      %v562 = vpop.permute.xlu0 %561
      %565 = vrot.lane.b32.xlu0 %v455, 24
      %v566 = vpop.permute.xlu0 %565
      %567 = vrot.lane.b32.xlu0 %v456, 24
      %v568 = vpop.permute.xlu0 %567
      %vm571 = vcmask 64512
      %v572 = vsel %vm571, %v455, %v534
      %v573 = vsel %vm571, %v456, %v536
      %vm574 = vcmask 130048
      %v575 = vsel %vm574, %v572, %v542
      %v576 = vsel %vm574, %v573, %v544
      %vm577 = vcmask 195584
      %v578 = vsel %vm577, %v575, %v548
      %v579 = vsel %vm577, %v576, %v550
      %vm580 = vcmask 261120
      %v581 = vsel %vm580, %v578, %v554
      %v582 = vsel %vm580, %v579, %v556
      %vm583 = vcmask 326656
      %v584 = vsel %vm583, %v581, %v560
      %v585 = vsel %vm583, %v582, %v562
      %vm586 = vcmask 392192
      %v587 = vsel %vm586, %v584, %v566
      %v588 = vsel %vm586, %v585, %v568
      %vm589 = vcmask 457728
      %v590 = vsel %vm589, %v587, %v477
      %v591 = vsel %vm589, %v588, %v478
      %v592 = vpack.c.bf16 %v591, %v590
      %v594 = vunpack.c.l.b16 %v592
      %v595 = vunpack.c.h.b16 %v592
      %v596 = vpack.c.b16 %v594, %v594
      %v597 = vpack.c.b16 %v595, %v595
      %vm600 = vcmask 519168
      %601 = vst.msk [vmem:[%s320] sm:$0xf] %vm600, %v596
      %602 = vst.msk [vmem:[%s320 + $0x4] sm:$0xf] %vm600, %v597
      %605 = vrot.lane.b32.xlu0 %v503, 64
      %v606 = vpop.permute.xlu0 %605
      %607 = vrot.lane.b32.xlu0 %v504, 64
      %v608 = vpop.permute.xlu0 %607
      %613 = vrot.lane.b32.xlu0 %v529, 40
      %v614 = vpop.permute.xlu0 %613
      %615 = vrot.lane.b32.xlu0 %v530, 40
      %v616 = vpop.permute.xlu0 %615
      %619 = vrot.lane.b32.xlu0 %v503, 72
      %v620 = vpop.permute.xlu0 %619
      %621 = vrot.lane.b32.xlu0 %v504, 72
      %v622 = vpop.permute.xlu0 %621
      %625 = vrot.lane.b32.xlu0 %v529, 48
      %v626 = vpop.permute.xlu0 %625
      %627 = vrot.lane.b32.xlu0 %v530, 48
      %v628 = vpop.permute.xlu0 %627
      %631 = vrot.lane.b32.xlu0 %v503, 80
      %v632 = vpop.permute.xlu0 %631
      %633 = vrot.lane.b32.xlu0 %v504, 80
      %v634 = vpop.permute.xlu0 %633
      %637 = vrot.lane.b32.xlu0 %v529, 56
      %v638 = vpop.permute.xlu0 %637
      %639 = vrot.lane.b32.xlu0 %v530, 56
      %v640 = vpop.permute.xlu0 %639
      %643 = vrot.lane.b32.xlu0 %v503, 88
      %v644 = vpop.permute.xlu0 %643
      %645 = vrot.lane.b32.xlu0 %v504, 88
      %v646 = vpop.permute.xlu0 %645
      %649 = vrot.lane.b32.xlu0 %v529, 64
      %v650 = vpop.permute.xlu0 %649
      %651 = vrot.lane.b32.xlu0 %v530, 64
      %v652 = vpop.permute.xlu0 %651
      %v655 = vsel %vm571, %v606, %v614
      %v656 = vsel %vm571, %v608, %v616
      %v657 = vsel %vm574, %v655, %v620
      %v658 = vsel %vm574, %v656, %v622
      %v659 = vsel %vm577, %v657, %v626
      %v660 = vsel %vm577, %v658, %v628
      %v661 = vsel %vm580, %v659, %v632
      %v662 = vsel %vm580, %v660, %v634
      %v663 = vsel %vm583, %v661, %v638
      %v664 = vsel %vm583, %v662, %v640
      %v665 = vsel %vm586, %v663, %v644
      %v666 = vsel %vm586, %v664, %v646
      %v667 = vsel %vm589, %v665, %v650
      %v668 = vsel %vm589, %v666, %v652
      %671 = vrot.lane.b32.xlu0 %v425, 64
      %v672 = vpop.permute.xlu0 %671
      %673 = vrot.lane.b32.xlu0 %v429, 64
      %v674 = vpop.permute.xlu0 %673
      %v677 = vsel %vm384, %v667, %v672
      %v678 = vsel %vm384, %v668, %v674
      %v679 = vpack.c.bf16 %v678, %v677
      %v681 = vunpack.c.l.b16 %v679
      %v682 = vunpack.c.h.b16 %v679
      %v683 = vpack.c.b16 %v681, %v681
      %v684 = vpack.c.b16 %v682, %v682
      %687 = vst [vmem:[%s330] sm:$0xf] %v683
      %688 = vst [vmem:[%s330 + $0x4] sm:$0xf] %v684
      %s689 = smul.u32 2, %s22
      %p690 = scmp.lt.s32.totalorder %s21, 1
      %s691 = scalar_select %p690, %s21, 1
      %p692 = scmp.lt.s32.totalorder %s689, 1
      %s693 = scalar_select %p692, %s689, 1
      %s694 = smul.addr %s691, 2
      %s695 = sadd.s32 %s693, %s694
      %s696 = smul.addr %s695, 4
      %s697 = scalar_lea.vmem %s4, %s696
      %s698 = smul.u32 2, %s22
      %p699 = scmp.lt.s32.totalorder %s21, 1
      %s700 = scalar_select %p699, %s21, 1
      %p701 = scmp.lt.s32.totalorder %s698, 1
      %s702 = scalar_select %p701, %s698, 1
      %s703 = smul.addr %s700, 2
      %s704 = sadd.s32 %s702, %s703
      %s705 = smul.addr %s704, 4
      %s706 = scalar_lea.vmem %s5, %s705
      // Predicated region
      $region37: #{ngpt_forward.7} parent=35 // pred_check
        %p707 = pneg %p150
      $region38: #{ngpt_forward.7} parent=35 // pred_check_branch
        %709 = sbr.rel (%p707) target = $region40
      $region39: #{ngpt_forward.7} parent=35 // pred_region
        %s710 = smul.u32 2, %s22
      $region40: #{ngpt_forward.7} parent=35 // pred_fallthru
        _
      // Predicated region
      $region41: #{ngpt_forward.7} parent=35 // pred_check
        %p711 = pneg %p178
      $region42: #{ngpt_forward.7} parent=35 // pred_check_branch
        %713 = sbr.rel (%p711) target = $region44
      $region43: #{ngpt_forward.7} parent=35 // pred_region
        %s714 = smul.u32 2, %s22
      $region44: #{ngpt_forward.7} parent=35 // pred_fallthru
        _
    $region36: #{ngpt_forward.7} parent=5 // pred_fallthru
      _
    %p715 = scmp.le.s32.totalorder 2, %s12
    // Predicated region
    $region45: #{ngpt_forward.7} parent=5 // pred_check
      %p716 = pneg %p715
    $region46: #{ngpt_forward.7} parent=5 // pred_check_branch
      %718 = sbr.rel (%p716) target = $region48
    $region47: #{ngpt_forward.7} parent=5 // pred_region
      %s719 = ssub.s32 %s12, 2
      // Predicated region
      $region49: #{ngpt_forward.7} parent=47 // pred_check
        %p720 = pneg %p156
      $region50: #{ngpt_forward.7} parent=47 // pred_check_branch
        %722 = sbr.rel (%p720) target = $region52
      $region51: #{ngpt_forward.7} parent=47 // pred_region
        %s723 = smul.u32 2, %s24
        %p724 = scmp.lt.s32.totalorder %s23, 1
        %s725 = scalar_select %p724, %s23, 1
        %p726 = scmp.lt.s32.totalorder %s723, 1
        %s727 = scalar_select %p726, %s723, 1
        %s728 = smul.addr %s725, 2
        %s729 = sadd.s32 %s727, %s728
        %s730 = smul.addr %s729, 4
        %s731 = scalar_lea.vmem %s4, %s730
      $region52: #{ngpt_forward.7} parent=47 // pred_fallthru
        _
      // Predicated region
      $region53: #{ngpt_forward.7} parent=47 // pred_check
        %p732 = pneg %p184
      $region54: #{ngpt_forward.7} parent=47 // pred_check_branch
        %734 = sbr.rel (%p732) target = $region56
      $region55: #{ngpt_forward.7} parent=47 // pred_region
        %s735 = smul.u32 2, %s24
        %p736 = scmp.lt.s32.totalorder %s23, 1
        %s737 = scalar_select %p736, %s23, 1
        %p738 = scmp.lt.s32.totalorder %s735, 1
        %s739 = scalar_select %p738, %s735, 1
        %s740 = smul.addr %s737, 2
        %s741 = sadd.s32 %s739, %s740
        %s742 = smul.addr %s741, 4
        %s743 = scalar_lea.vmem %s5, %s742
      $region56: #{ngpt_forward.7} parent=47 // pred_fallthru
        _
    $region48: #{ngpt_forward.7} parent=5 // pred_fallthru
      _
  $region6: #{ngpt_forward.7} parent=0 // loop_footer
    %s16 = sadd.s32 1, %s12
  $region7: #{ngpt_forward.7} parent=0 // loop_footer_branch
    %11 = sbr.rel target = $region3
  $region8: #{ngpt_forward.7} parent=0 // loop_exit
    _

// kernel: ngpt_forward.13
$region0: #{ngpt_forward.13}
  #allocation0 [shape = 'u32[]', space=smem, size = 0x4, offset = 0x4, fixed_abs, tag = 'smem constant byte address 0x4 - core index']
  #allocation1 [shape = 'u32[144,128]{1,0:T(1,128)}', space=vmem, size = 0x12000, scoped, tag = 'internal scratch']
  %s0 = inlined_call_operand.vmem [shape: f32[32,64], index: 0, kind: input, shape index: {}]
  %s1 = inlined_call_operand.vmem [shape: bf16[64,256], index: 1, kind: input, shape index: {}]
  %s2 = inlined_call_operand.vmem [shape: f32[1,256], index: 2, kind: input, shape index: {}]
  %s3 = inlined_call_operand.hbm [shape: f32[32,256], index: 3, kind: output, shape index: {}]
  %s4 = sld [smem:[#allocation0]]
  $region22: #{ngpt_forward.13} parent=0
    _
  %s6 = ssub.s32 1, %s4
  %s7 = scalar_select 0, %s6, %s4
  $region1: #{ngpt_forward.13} parent=0
    #allocation2 [shape = 'u8[32768]{0}', space=vmem, size = 0x8000, scoped, tag = 'output window, operand 0, single buffered']
    #allocation3 [shape = 's32[1]{0}', space=sflag, size = 0x4, scoped, tag = 'scoped memory for ngpt_forward.13']
    %8 = vsyncpa [#allocation3], 0
    // Predicated region
    $region2: #{ngpt_forward.13} parent=1 // pred_check
      _
    $region3: #{ngpt_forward.13} parent=1 // pred_check_branch
      %10 = sbr.rel (0) target = $region5
    $region4: #{ngpt_forward.13} parent=1 // pred_region
      _
    $region5: #{ngpt_forward.13} parent=1 // pred_fallthru
      _
    // Predicated region
    $region6: #{ngpt_forward.13} parent=1 // pred_check
      _
    $region7: #{ngpt_forward.13} parent=1 // pred_check_branch
      %12 = sbr.rel (0) target = $region9
    $region8: #{ngpt_forward.13} parent=1 // pred_region
      _
    $region9: #{ngpt_forward.13} parent=1 // pred_fallthru
      _
    // Predicated region
    $region10: #{ngpt_forward.13} parent=1 // pred_check
      _
    $region11: #{ngpt_forward.13} parent=1 // pred_check_branch
      %14 = sbr.rel (0) target = $region13
    $region12: #{ngpt_forward.13} parent=1 // pred_region
      _
    $region13: #{ngpt_forward.13} parent=1 // pred_fallthru
      _
    %v16 = vld [vmem:[%s0] sm:$0xff]
    %v17 = vld [vmem:[%s0 + $0x8] sm:$0xff]
    %v18 = vld [vmem:[%s0 + $0x10] sm:$0xff]
    %v19 = vld [vmem:[%s0 + $0x18] sm:$0xff]
    %v20 = vpack.c.bf16 %v17, %v16
    %v21 = vpack.c.bf16 %v19, %v18
    %v22 = vld [vmem:[%s1] sm:$0xff]
    %v23 = vld [vmem:[%s1 + $0x8] sm:$0xff]
    %v24 = vld [vmem:[%s1 + $0x10] sm:$0xff]
    %v25 = vld [vmem:[%s1 + $0x18] sm:$0xff]
    %v26 = vld [vmem:[%s1 + $0x20] sm:$0xff]
    %v27 = vld [vmem:[%s1 + $0x28] sm:$0xff]
    %v28 = vld [vmem:[%s1 + $0x30] sm:$0xff]
    %v29 = vld [vmem:[%s1 + $0x38] sm:$0xff]
    %v38 = vunpack.c.l.b16 %v22
    %v39 = vunpack.c.h.b16 %v22
    %v40 = vunpack.c.l.b16 %v23
    %v41 = vunpack.c.h.b16 %v23
    %v42 = vunpack.c.l.b16 %v24
    %v43 = vunpack.c.h.b16 %v24
    %v44 = vunpack.c.l.b16 %v25
    %v45 = vunpack.c.h.b16 %v25
    %v46 = vunpack.c.l.b16 %v26
    %v47 = vunpack.c.h.b16 %v26
    %v48 = vunpack.c.l.b16 %v27
    %v49 = vunpack.c.h.b16 %v27
    %v50 = vunpack.c.l.b16 %v28
    %v51 = vunpack.c.h.b16 %v28
    %v52 = vunpack.c.l.b16 %v29
    %v53 = vunpack.c.h.b16 %v29
    %v54 = vpack.c.b16 %v40, %v38
    %v55 = vpack.c.b16 %v41, %v39
    %v56 = vpack.c.b16 %v44, %v42
    %v57 = vpack.c.b16 %v45, %v43
    %v58 = vpack.c.b16 %v48, %v46
    %v59 = vpack.c.b16 %v49, %v47
    %v60 = vpack.c.b16 %v52, %v50
    %v61 = vpack.c.b16 %v53, %v51
    %vm70 = vcmask 523264
    %v72 = vsel %vm70, %v20, 0
    %v75 = vsel %vm70, %v21, 0
    %77 = vmatprep.subr.bf16.mxu0 %v55
    %78 = vmatpush1.bf16.msra.mxu0 %v54
    %79 = vmatprep.subr.bf16.mxu0 %v57
    %80 = vmatpush1.bf16.msra.mxu0 %v56
    %81 = vmatprep.subr.bf16.mxu0 %v59
    %82 = vmatpush1.bf16.msra.mxu0 %v58
    %83 = vmatprep.subr.bf16.mxu0 %v61
    %84 = vmatpush1.bf16.msra.mxu0 %v60
    %85 = vmatprep.subr.bf16.mxu0 0
    %86 = vmatpush1.bf16.msra.mxu0 0
    %87 = vmatprep.subr.bf16.mxu0 0
    %88 = vmatpush1.bf16.msra.mxu0 0
    %89 = vmatprep.subr.bf16.mxu0 0
    %90 = vmatpush1.bf16.msra.mxu0 0
    %91 = vmatprep.subr.bf16.mxu0 0
    %92 = vmatpush1.bf16.msra.mxu0 0
    %93 = vmatprep.subr.bf16.mxu0 0
    %94 = vmatpush1.bf16.msra.mxu0 0
    %95 = vmatprep.subr.bf16.mxu0 0
    %96 = vmatpush1.bf16.msra.mxu0 0
    %97 = vmatprep.subr.bf16.mxu0 0
    %98 = vmatpush1.bf16.msra.mxu0 0
    %99 = vmatprep.subr.bf16.mxu0 0
    %100 = vmatpush1.bf16.msra.mxu0 0
    %101 = vmatprep.subr.bf16.mxu0 0
    %102 = vmatpush1.bf16.msra.mxu0 0
    %103 = vmatprep.subr.bf16.mxu0 0
    %104 = vmatpush1.bf16.msra.mxu0 0
    %105 = vmatprep.subr.bf16.mxu0 0
    %106 = vmatpush1.bf16.msra.mxu0 0
    %107 = vmatprep.subr.bf16.mxu0 0
    %108 = vmatpush1.bf16.msra.mxu0 0
    %109 = vmatprep.mubr.bf16.mxu0 0
    %110 = vmatmul.mubr.bf16.gmra.mrb[0].mxu0 %v72
    %v111 = vpop.f32.mrb[0].mxu0
    %v112 = vadd.f32 0.0, %v111
    %v113 = vpop.f32.mrb[0].mxu0
    %v114 = vadd.f32 0.0, %v113
    %v115 = vpop.f32.mrb[0].mxu0
    %v116 = vadd.f32 0.0, %v115
    %v117 = vpop.f32.mrb[0].mxu0
    %v118 = vadd.f32 0.0, %v117
    %119 = vmatprep.mubr.bf16.mxu0 0
    %120 = vmatmul.mubr.bf16.gmra.mrb[0].mxu0 %v75
    %v121 = vpop.f32.mrb[0].mxu0
    %v122 = vadd.f32 0.0, %v121
    %v123 = vpop.f32.mrb[0].mxu0
    %v124 = vadd.f32 0.0, %v123
    %v125 = vpop.f32.mrb[0].mxu0
    %v126 = vadd.f32 0.0, %v125
    %v127 = vpop.f32.mrb[0].mxu0
    %v128 = vadd.f32 0.0, %v127
    %129 = vdwg.mxu0
    %v130 = vld [vmem:[%s2] sm:$0x3]
    %v132 = vlaneseq
    %v133 = vshrl.u32 %v132, 7
    %v134 = vsub.s32 0, %v133
    %v135 = vrot.slane %v130, %v134
    %v136 = vlaneseq
    %v137 = vshrl.u32 %v136, 7
    %v138 = vsub.s32 1, %v137
    %v139 = vrot.slane %v130, %v138
    %v142 = vmul.f32 %v112, %v135
    %v143 = vmul.f32 %v114, %v139
    %v144 = vmul.f32 %v116, %v135
    %v145 = vmul.f32 %v118, %v139
    %v146 = vmul.f32 %v122, %v135
    %v147 = vmul.f32 %v124, %v139
    %v148 = vmul.f32 %v126, %v135
    %v149 = vmul.f32 %v128, %v139
    %150 = vst [vmem:[#allocation2] sm:$0xff] %v142
    %151 = vst [vmem:[#allocation2 + $0x8] sm:$0xff] %v143
    %152 = vst [vmem:[#allocation2 + $0x10] sm:$0xff] %v144
    %153 = vst [vmem:[#allocation2 + $0x18] sm:$0xff] %v145
    %154 = vst [vmem:[#allocation2 + $0x20] sm:$0xff] %v146
    %155 = vst [vmem:[#allocation2 + $0x28] sm:$0xff] %v147
    %156 = vst [vmem:[#allocation2 + $0x30] sm:$0xff] %v148
    %157 = vst [vmem:[#allocation2 + $0x38] sm:$0xff] %v149
    // Predicated region
    $region14: #{ngpt_forward.13} parent=1 // pred_check
      _
    $region15: #{ngpt_forward.13} parent=1 // pred_check_branch
      %159 = sbr.rel (0) target = $region17
    $region16: #{ngpt_forward.13} parent=1 // pred_region
      %s161 = ssub.s32 1024, 1024
      %162 = vsyncadd [#allocation3], %s161
      %s163 = sshll.u32 [#allocation2], 4
      %s164 = int_to_ptr.vmem [resolvable:$true] %s163
      %169 = dma.vmem_to_hbm [thread:$0]  %s164, 1024, %s3, [#allocation3], 256, 256, 16
    $region17: #{ngpt_forward.13} parent=1 // pred_fallthru
      _
    // Predicated region
    $region18: #{ngpt_forward.13} parent=1 // pred_check
      _
    $region19: #{ngpt_forward.13} parent=1 // pred_check_branch
      %171 = sbr.rel (0) target = $region21
    $region20: #{ngpt_forward.13} parent=1 // pred_region
      %172 = dma.done [#allocation3], 1024
    $region21: #{ngpt_forward.13} parent=1 // pred_fallthru
      _
    %173 = vsyncpa [#allocation3], 1

// kernel: ngpt_forward.9
$region0: #{ngpt_forward.9}
  #allocation0 [shape = 'u32[]', space=smem, size = 0x4, offset = 0x4, fixed_abs, tag = 'smem constant byte address 0x4 - core index']
  #allocation1 [shape = 'u32[144,128]{1,0:T(1,128)}', space=vmem, size = 0x12000, scoped, tag = 'internal scratch']
  %s0 = inlined_call_operand.vmem [shape: f32[32,64], index: 0, kind: input, shape index: {}]
  %s1 = inlined_call_operand.vmem [shape: bf16[64,512], index: 1, kind: input, shape index: {}]
  %s2 = inlined_call_operand.vmem [shape: bf16[256,64], index: 2, kind: input, shape index: {}]
  %s3 = inlined_call_operand.vmem [shape: f32[1,64], index: 3, kind: input, shape index: {}]
  %s4 = inlined_call_operand.vmem [shape: f32[32,64], index: 4, kind: output, shape index: {}]
  %s5 = sld [smem:[#allocation0]]
  $region26: #{ngpt_forward.9} parent=0
    _
  %s7 = ssub.s32 1, %s5
  %s8 = scalar_select 0, %s7, %s5
  // Predicated region
  $region2: #{ngpt_forward.9} parent=0 // pred_check
    _
  $region3: #{ngpt_forward.9} parent=0 // pred_check_branch
    %10 = sbr.rel (0) target = $region5
  $region4: #{ngpt_forward.9} parent=0 // pred_region
    _
  $region5: #{ngpt_forward.9} parent=0 // pred_fallthru
    _
  // Predicated region
  $region6: #{ngpt_forward.9} parent=0 // pred_check
    _
  $region7: #{ngpt_forward.9} parent=0 // pred_check_branch
    %12 = sbr.rel (0) target = $region9
  $region8: #{ngpt_forward.9} parent=0 // pred_region
    _
  $region9: #{ngpt_forward.9} parent=0 // pred_fallthru
    _
  // Predicated region
  $region10: #{ngpt_forward.9} parent=0 // pred_check
    _
  $region11: #{ngpt_forward.9} parent=0 // pred_check_branch
    %14 = sbr.rel (0) target = $region13
  $region12: #{ngpt_forward.9} parent=0 // pred_region
    _
  $region13: #{ngpt_forward.9} parent=0 // pred_fallthru
    _
  // Predicated region
  $region14: #{ngpt_forward.9} parent=0 // pred_check
    _
  $region15: #{ngpt_forward.9} parent=0 // pred_check_branch
    %16 = sbr.rel (0) target = $region17
  $region16: #{ngpt_forward.9} parent=0 // pred_region
    _
  $region17: #{ngpt_forward.9} parent=0 // pred_fallthru
    _
  %v18 = vld [vmem:[%s0] sm:$0xff]
  %v19 = vld [vmem:[%s0 + $0x8] sm:$0xff]
  %v20 = vld [vmem:[%s0 + $0x10] sm:$0xff]
  %v21 = vld [vmem:[%s0 + $0x18] sm:$0xff]
  %v22 = vpack.c.bf16 %v19, %v18
  %v23 = vpack.c.bf16 %v21, %v20
  %v24 = vld [vmem:[%s1] sm:$0xff]
  %v25 = vld [vmem:[%s1 + $0x8] sm:$0xff]
  %v26 = vld [vmem:[%s1 + $0x10] sm:$0xff]
  %v27 = vld [vmem:[%s1 + $0x18] sm:$0xff]
  %v28 = vld [vmem:[%s1 + $0x20] sm:$0xff]
  %v29 = vld [vmem:[%s1 + $0x28] sm:$0xff]
  %v30 = vld [vmem:[%s1 + $0x30] sm:$0xff]
  %v31 = vld [vmem:[%s1 + $0x38] sm:$0xff]
  %v32 = vld [vmem:[%s1 + $0x40] sm:$0xff]
  %v33 = vld [vmem:[%s1 + $0x48] sm:$0xff]
  %v34 = vld [vmem:[%s1 + $0x50] sm:$0xff]
  %v35 = vld [vmem:[%s1 + $0x58] sm:$0xff]
  %v36 = vld [vmem:[%s1 + $0x60] sm:$0xff]
  %v37 = vld [vmem:[%s1 + $0x68] sm:$0xff]
  %v38 = vld [vmem:[%s1 + $0x70] sm:$0xff]
  %v39 = vld [vmem:[%s1 + $0x78] sm:$0xff]
  %v56 = vunpack.c.l.b16 %v24
  %v57 = vunpack.c.h.b16 %v24
  %v58 = vunpack.c.l.b16 %v25
  %v59 = vunpack.c.h.b16 %v25
  %v60 = vunpack.c.l.b16 %v26
  %v61 = vunpack.c.h.b16 %v26
  %v62 = vunpack.c.l.b16 %v27
  %v63 = vunpack.c.h.b16 %v27
  %v64 = vunpack.c.l.b16 %v28
  %v65 = vunpack.c.h.b16 %v28
  %v66 = vunpack.c.l.b16 %v29
  %v67 = vunpack.c.h.b16 %v29
  %v68 = vunpack.c.l.b16 %v30
  %v69 = vunpack.c.h.b16 %v30
  %v70 = vunpack.c.l.b16 %v31
  %v71 = vunpack.c.h.b16 %v31
  %v72 = vunpack.c.l.b16 %v32
  %v73 = vunpack.c.h.b16 %v32
  %v74 = vunpack.c.l.b16 %v33
  %v75 = vunpack.c.h.b16 %v33
  %v76 = vunpack.c.l.b16 %v34
  %v77 = vunpack.c.h.b16 %v34
  %v78 = vunpack.c.l.b16 %v35
  %v79 = vunpack.c.h.b16 %v35
  %v80 = vunpack.c.l.b16 %v36
  %v81 = vunpack.c.h.b16 %v36
  %v82 = vunpack.c.l.b16 %v37
  %v83 = vunpack.c.h.b16 %v37
  %v84 = vunpack.c.l.b16 %v38
  %v85 = vunpack.c.h.b16 %v38
  %v86 = vunpack.c.l.b16 %v39
  %v87 = vunpack.c.h.b16 %v39
  %v88 = vpack.c.b16 %v60, %v56
  %v89 = vpack.c.b16 %v61, %v57
  %v90 = vpack.c.b16 %v62, %v58
  %v91 = vpack.c.b16 %v63, %v59
  %v92 = vpack.c.b16 %v68, %v64
  %v93 = vpack.c.b16 %v69, %v65
  %v94 = vpack.c.b16 %v70, %v66
  %v95 = vpack.c.b16 %v71, %v67
  %v96 = vpack.c.b16 %v76, %v72
  %v97 = vpack.c.b16 %v77, %v73
  %v98 = vpack.c.b16 %v78, %v74
  %v99 = vpack.c.b16 %v79, %v75
  %v100 = vpack.c.b16 %v84, %v80
  %v101 = vpack.c.b16 %v85, %v81
  %v102 = vpack.c.b16 %v86, %v82
  %v103 = vpack.c.b16 %v87, %v83
  %vm120 = vcmask 523264
  %v122 = vsel %vm120, %v22, 0
  %v125 = vsel %vm120, %v23, 0
  %127 = vmatprep.subr.bf16.mxu0 %v89
  %128 = vmatpush1.bf16.msra.mxu0 %v88
  %129 = vmatprep.subr.bf16.mxu0 %v93
  %130 = vmatpush1.bf16.msra.mxu0 %v92
  %131 = vmatprep.subr.bf16.mxu0 %v97
  %132 = vmatpush1.bf16.msra.mxu0 %v96
  %133 = vmatprep.subr.bf16.mxu0 %v101
  %134 = vmatpush1.bf16.msra.mxu0 %v100
  %135 = vmatprep.subr.bf16.mxu0 0
  %136 = vmatpush1.bf16.msra.mxu0 0
  %137 = vmatprep.subr.bf16.mxu0 0
  %138 = vmatpush1.bf16.msra.mxu0 0
  %139 = vmatprep.subr.bf16.mxu0 0
  %140 = vmatpush1.bf16.msra.mxu0 0
  %141 = vmatprep.subr.bf16.mxu0 0
  %142 = vmatpush1.bf16.msra.mxu0 0
  %143 = vmatprep.subr.bf16.mxu0 0
  %144 = vmatpush1.bf16.msra.mxu0 0
  %145 = vmatprep.subr.bf16.mxu0 0
  %146 = vmatpush1.bf16.msra.mxu0 0
  %147 = vmatprep.subr.bf16.mxu0 0
  %148 = vmatpush1.bf16.msra.mxu0 0
  %149 = vmatprep.subr.bf16.mxu0 0
  %150 = vmatpush1.bf16.msra.mxu0 0
  %151 = vmatprep.subr.bf16.mxu0 0
  %152 = vmatpush1.bf16.msra.mxu0 0
  %153 = vmatprep.subr.bf16.mxu0 0
  %154 = vmatpush1.bf16.msra.mxu0 0
  %155 = vmatprep.subr.bf16.mxu0 0
  %156 = vmatpush1.bf16.msra.mxu0 0
  %157 = vmatprep.subr.bf16.mxu0 0
  %158 = vmatpush1.bf16.msra.mxu0 0
  %159 = vmatprep.mubr.bf16.mxu0 0
  %160 = vmatmul.mubr.bf16.gmra.mrb[0].mxu0 %v122
  %v161 = vpop.f32.mrb[0].mxu0
  %v162 = vadd.f32 0.0, %v161
  %v163 = vpop.f32.mrb[0].mxu0
  %v164 = vadd.f32 0.0, %v163
  %v165 = vpop.f32.mrb[0].mxu0
  %v166 = vadd.f32 0.0, %v165
  %v167 = vpop.f32.mrb[0].mxu0
  %v168 = vadd.f32 0.0, %v167
  %169 = vmatprep.mubr.bf16.mxu0 0
  %170 = vmatmul.mubr.bf16.gmra.mrb[0].mxu0 %v125
  %v171 = vpop.f32.mrb[0].mxu0
  %v172 = vadd.f32 0.0, %v171
  %v173 = vpop.f32.mrb[0].mxu0
  %v174 = vadd.f32 0.0, %v173
  %v175 = vpop.f32.mrb[0].mxu0
  %v176 = vadd.f32 0.0, %v175
  %v177 = vpop.f32.mrb[0].mxu0
  %v178 = vadd.f32 0.0, %v177
  %179 = vdwg.mxu0
  %180 = vmatprep.subr.bf16.mxu0 %v91
  %181 = vmatpush1.bf16.msra.mxu0 %v90
  %182 = vmatprep.subr.bf16.mxu0 %v95
  %183 = vmatpush1.bf16.msra.mxu0 %v94
  %184 = vmatprep.subr.bf16.mxu0 %v99
  %185 = vmatpush1.bf16.msra.mxu0 %v98
  %186 = vmatprep.subr.bf16.mxu0 %v103
  %187 = vmatpush1.bf16.msra.mxu0 %v102
  %188 = vmatprep.subr.bf16.mxu0 0
  %189 = vmatpush1.bf16.msra.mxu0 0
  %190 = vmatprep.subr.bf16.mxu0 0
  %191 = vmatpush1.bf16.msra.mxu0 0
  %192 = vmatprep.subr.bf16.mxu0 0
  %193 = vmatpush1.bf16.msra.mxu0 0
  %194 = vmatprep.subr.bf16.mxu0 0
  %195 = vmatpush1.bf16.msra.mxu0 0
  %196 = vmatprep.subr.bf16.mxu0 0
  %197 = vmatpush1.bf16.msra.mxu0 0
  %198 = vmatprep.subr.bf16.mxu0 0
  %199 = vmatpush1.bf16.msra.mxu0 0
  %200 = vmatprep.subr.bf16.mxu0 0
  %201 = vmatpush1.bf16.msra.mxu0 0
  %202 = vmatprep.subr.bf16.mxu0 0
  %203 = vmatpush1.bf16.msra.mxu0 0
  %204 = vmatprep.subr.bf16.mxu0 0
  %205 = vmatpush1.bf16.msra.mxu0 0
  %206 = vmatprep.subr.bf16.mxu0 0
  %207 = vmatpush1.bf16.msra.mxu0 0
  %208 = vmatprep.subr.bf16.mxu0 0
  %209 = vmatpush1.bf16.msra.mxu0 0
  %210 = vmatprep.subr.bf16.mxu0 0
  %211 = vmatpush1.bf16.msra.mxu0 0
  %212 = vmatprep.mubr.bf16.mxu0 0
  %213 = vmatmul.mubr.bf16.gmra.mrb[0].mxu0 %v122
  %v214 = vpop.f32.mrb[0].mxu0
  %v215 = vadd.f32 0.0, %v214
  %v216 = vpop.f32.mrb[0].mxu0
  %v217 = vadd.f32 0.0, %v216
  %v218 = vpop.f32.mrb[0].mxu0
  %v219 = vadd.f32 0.0, %v218
  %v220 = vpop.f32.mrb[0].mxu0
  %v221 = vadd.f32 0.0, %v220
  %222 = vmatprep.mubr.bf16.mxu0 0
  %223 = vmatmul.mubr.bf16.gmra.mrb[0].mxu0 %v125
  %v224 = vpop.f32.mrb[0].mxu0
  %v225 = vadd.f32 0.0, %v224
  %v226 = vpop.f32.mrb[0].mxu0
  %v227 = vadd.f32 0.0, %v226
  %v228 = vpop.f32.mrb[0].mxu0
  %v229 = vadd.f32 0.0, %v228
  %v230 = vpop.f32.mrb[0].mxu0
  %v231 = vadd.f32 0.0, %v230
  %232 = vdwg.mxu0
  %v233 = vxor.u32 %v215, 2147483648
  %v234 = vxor.u32 %v217, 2147483648
  %v235 = vxor.u32 %v219, 2147483648
  %v236 = vxor.u32 %v221, 2147483648
  %v237 = vxor.u32 %v225, 2147483648
  %v238 = vxor.u32 %v227, 2147483648
  %v239 = vxor.u32 %v229, 2147483648
  %v240 = vxor.u32 %v231, 2147483648
  %v241 = vmul.f32 %v233, 1.442695
  %v242 = vpow.pop %v241
  %v243 = vmul.f32 %v234, 1.442695
  %v244 = vpow.pop %v243
  %v245 = vmul.f32 %v235, 1.442695
  %v246 = vpow.pop %v245
  %v247 = vmul.f32 %v236, 1.442695
  %v248 = vpow.pop %v247
  %v249 = vmul.f32 %v237, 1.442695
  %v250 = vpow.pop %v249
  %v251 = vmul.f32 %v238, 1.442695
  %v252 = vpow.pop %v251
  %v253 = vmul.f32 %v239, 1.442695
  %v254 = vpow.pop %v253
  %v255 = vmul.f32 %v240, 1.442695
  %v256 = vpow.pop %v255
  %v257 = vadd.f32 %v242, 1.0
  %v258 = vadd.f32 %v244, 1.0
  %v259 = vadd.f32 %v246, 1.0
  %v260 = vadd.f32 %v248, 1.0
  %v261 = vadd.f32 %v250, 1.0
  %v262 = vadd.f32 %v252, 1.0
  %v263 = vadd.f32 %v254, 1.0
  %v264 = vadd.f32 %v256, 1.0
  %v265 = vrcp.pop %v257
  %v266 = vmul.f32 1.0, %v265
  %v267 = vrcp.pop %v258
  %v268 = vmul.f32 1.0, %v267
  %v269 = vrcp.pop %v259
  %v270 = vmul.f32 1.0, %v269
  %v271 = vrcp.pop %v260
  %v272 = vmul.f32 1.0, %v271
  %v273 = vrcp.pop %v261
  %v274 = vmul.f32 1.0, %v273
  %v275 = vrcp.pop %v262
  %v276 = vmul.f32 1.0, %v275
  %v277 = vrcp.pop %v263
  %v278 = vmul.f32 1.0, %v277
  %v279 = vrcp.pop %v264
  %v280 = vmul.f32 1.0, %v279
  %v281 = vmul.f32 %v215, %v266
  %v282 = vmul.f32 %v217, %v268
  %v283 = vmul.f32 %v219, %v270
  %v284 = vmul.f32 %v221, %v272
  %v285 = vmul.f32 %v225, %v274
  %v286 = vmul.f32 %v227, %v276
  %v287 = vmul.f32 %v229, %v278
  %v288 = vmul.f32 %v231, %v280
  %v289 = vmul.f32 %v281, %v162
  %v290 = vmul.f32 %v282, %v164
  %v291 = vmul.f32 %v283, %v166
  %v292 = vmul.f32 %v284, %v168
  %v293 = vmul.f32 %v285, %v172
  %v294 = vmul.f32 %v286, %v174
  %v295 = vmul.f32 %v287, %v176
  %v296 = vmul.f32 %v288, %v178
  %v297 = vpack.c.bf16 %v291, %v289
  %v298 = vpack.c.bf16 %v292, %v290
  %v299 = vpack.c.bf16 %v295, %v293
  %v300 = vpack.c.bf16 %v296, %v294
  %v301 = vld [vmem:[%s2] sm:$0xf]
  %v302 = vld [vmem:[%s2 + $0x4] sm:$0xf]
  %v303 = vld [vmem:[%s2 + $0x8] sm:$0xf]
  %v304 = vld [vmem:[%s2 + $0xc] sm:$0xf]
  %v305 = vld [vmem:[%s2 + $0x10] sm:$0xf]
  %v306 = vld [vmem:[%s2 + $0x14] sm:$0xf]
  %v307 = vld [vmem:[%s2 + $0x18] sm:$0xf]
  %v308 = vld [vmem:[%s2 + $0x1c] sm:$0xf]
  %v309 = vld [vmem:[%s2 + $0x20] sm:$0xf]
  %v310 = vld [vmem:[%s2 + $0x24] sm:$0xf]
  %v311 = vld [vmem:[%s2 + $0x28] sm:$0xf]
  %v312 = vld [vmem:[%s2 + $0x2c] sm:$0xf]
  %v313 = vld [vmem:[%s2 + $0x30] sm:$0xf]
  %v314 = vld [vmem:[%s2 + $0x34] sm:$0xf]
  %v315 = vld [vmem:[%s2 + $0x38] sm:$0xf]
  %v316 = vld [vmem:[%s2 + $0x3c] sm:$0xf]
  %v317 = vld [vmem:[%s2 + $0x40] sm:$0xf]
  %v318 = vld [vmem:[%s2 + $0x44] sm:$0xf]
  %v319 = vld [vmem:[%s2 + $0x48] sm:$0xf]
  %v320 = vld [vmem:[%s2 + $0x4c] sm:$0xf]
  %v321 = vld [vmem:[%s2 + $0x50] sm:$0xf]
  %v322 = vld [vmem:[%s2 + $0x54] sm:$0xf]
  %v323 = vld [vmem:[%s2 + $0x58] sm:$0xf]
  %v324 = vld [vmem:[%s2 + $0x5c] sm:$0xf]
  %v325 = vld [vmem:[%s2 + $0x60] sm:$0xf]
  %v326 = vld [vmem:[%s2 + $0x64] sm:$0xf]
  %v327 = vld [vmem:[%s2 + $0x68] sm:$0xf]
  %v328 = vld [vmem:[%s2 + $0x6c] sm:$0xf]
  %v329 = vld [vmem:[%s2 + $0x70] sm:$0xf]
  %v330 = vld [vmem:[%s2 + $0x74] sm:$0xf]
  %v331 = vld [vmem:[%s2 + $0x78] sm:$0xf]
  %v332 = vld [vmem:[%s2 + $0x7c] sm:$0xf]
  %v365 = vunpack.c.l.b16 %v301
  %v366 = vunpack.c.l.b16 %v302
  %v367 = vunpack.c.l.b16 %v303
  %v368 = vunpack.c.l.b16 %v304
  %v369 = vunpack.c.l.b16 %v305
  %v370 = vunpack.c.l.b16 %v306
  %v371 = vunpack.c.l.b16 %v307
  %v372 = vunpack.c.l.b16 %v308
  %v373 = vunpack.c.l.b16 %v309
  %v374 = vunpack.c.l.b16 %v310
  %v375 = vunpack.c.l.b16 %v311
  %v376 = vunpack.c.l.b16 %v312
  %v377 = vunpack.c.l.b16 %v313
  %v378 = vunpack.c.l.b16 %v314
  %v379 = vunpack.c.l.b16 %v315
  %v380 = vunpack.c.l.b16 %v316
  %v381 = vunpack.c.l.b16 %v317
  %v382 = vunpack.c.l.b16 %v318
  %v383 = vunpack.c.l.b16 %v319
  %v384 = vunpack.c.l.b16 %v320
  %v385 = vunpack.c.l.b16 %v321
  %v386 = vunpack.c.l.b16 %v322
  %v387 = vunpack.c.l.b16 %v323
  %v388 = vunpack.c.l.b16 %v324
  %v389 = vunpack.c.l.b16 %v325
  %v390 = vunpack.c.l.b16 %v326
  %v391 = vunpack.c.l.b16 %v327
  %v392 = vunpack.c.l.b16 %v328
  %v393 = vunpack.c.l.b16 %v329
  %v394 = vunpack.c.l.b16 %v330
  %v395 = vunpack.c.l.b16 %v331
  %v396 = vunpack.c.l.b16 %v332
  %v397 = vpack.c.b16 %v366, %v365
  %v398 = vpack.c.b16 %v368, %v367
  %v399 = vpack.c.b16 %v370, %v369
  %v400 = vpack.c.b16 %v372, %v371
  %v401 = vpack.c.b16 %v374, %v373
  %v402 = vpack.c.b16 %v376, %v375
  %v403 = vpack.c.b16 %v378, %v377
  %v404 = vpack.c.b16 %v380, %v379
  %v405 = vpack.c.b16 %v382, %v381
  %v406 = vpack.c.b16 %v384, %v383
  %v407 = vpack.c.b16 %v386, %v385
  %v408 = vpack.c.b16 %v388, %v387
  %v409 = vpack.c.b16 %v390, %v389
  %v410 = vpack.c.b16 %v392, %v391
  %v411 = vpack.c.b16 %v394, %v393
  %v412 = vpack.c.b16 %v396, %v395
  %429 = vmatprep.subr.bf16.mxu0 0
  %430 = vmatpush1.bf16.msra.mxu0 %v397
  %431 = vmatprep.subr.bf16.mxu0 0
  %432 = vmatpush1.bf16.msra.mxu0 %v398
  %433 = vmatprep.subr.bf16.mxu0 0
  %434 = vmatpush1.bf16.msra.mxu0 %v399
  %435 = vmatprep.subr.bf16.mxu0 0
  %436 = vmatpush1.bf16.msra.mxu0 %v400
  %437 = vmatprep.subr.bf16.mxu0 0
  %438 = vmatpush1.bf16.msra.mxu0 %v401
  %439 = vmatprep.subr.bf16.mxu0 0
  %440 = vmatpush1.bf16.msra.mxu0 %v402
  %441 = vmatprep.subr.bf16.mxu0 0
  %442 = vmatpush1.bf16.msra.mxu0 %v403
  %443 = vmatprep.subr.bf16.mxu0 0
  %444 = vmatpush1.bf16.msra.mxu0 %v404
  %445 = vmatprep.subr.bf16.mxu0 0
  %446 = vmatpush1.bf16.msra.mxu0 %v405
  %447 = vmatprep.subr.bf16.mxu0 0
  %448 = vmatpush1.bf16.msra.mxu0 %v406
  %449 = vmatprep.subr.bf16.mxu0 0
  %450 = vmatpush1.bf16.msra.mxu0 %v407
  %451 = vmatprep.subr.bf16.mxu0 0
  %452 = vmatpush1.bf16.msra.mxu0 %v408
  %453 = vmatprep.subr.bf16.mxu0 0
  %454 = vmatpush1.bf16.msra.mxu0 %v409
  %455 = vmatprep.subr.bf16.mxu0 0
  %456 = vmatpush1.bf16.msra.mxu0 %v410
  %457 = vmatprep.subr.bf16.mxu0 0
  %458 = vmatpush1.bf16.msra.mxu0 %v411
  %459 = vmatprep.subr.bf16.mxu0 0
  %460 = vmatpush1.bf16.msra.mxu0 %v412
  %461 = vmatprep.mubr.bf16.mxu0 %v298
  %462 = vmatmul.mubr.bf16.gmra.mrb[0].mxu0 %v297
  %v463 = vpop.f32.mrb[0].mxu0
  %v464 = vadd.f32 0.0, %v463
  %v465 = vpop.f32.mrb[0].mxu0
  %v466 = vpop.f32.mrb[0].mxu0
  %v467 = vadd.f32 0.0, %v466
  %v468 = vpop.f32.mrb[0].mxu0
  %469 = vmatprep.mubr.bf16.mxu0 %v300
  %470 = vmatmul.mubr.bf16.gmra.mrb[0].mxu0 %v299
  %v471 = vpop.f32.mrb[0].mxu0
  %v472 = vadd.f32 0.0, %v471
  %v473 = vpop.f32.mrb[0].mxu0
  %v474 = vpop.f32.mrb[0].mxu0
  %v475 = vadd.f32 0.0, %v474
  %v476 = vpop.f32.mrb[0].mxu0
  %477 = vdwg.mxu0
  %v478 = vmul.f32 %v464, %v464
  %v479 = vmul.f32 %v467, %v467
  %v480 = vmul.f32 %v472, %v472
  %v481 = vmul.f32 %v475, %v475
  %v482 = vsel %vm120, %v478, 0.0
  %483 = vadd.xlane.f32.xlu0 %v482
  %v484 = vpop.xlane.xlu0 %483
  %v485 = vsel %vm120, %v479, 0.0
  %486 = vadd.xlane.f32.xlu0 %v485
  %v487 = vpop.xlane.xlu0 %486
  %v488 = vsel %vm120, %v480, 0.0
  %489 = vadd.xlane.f32.xlu0 %v488
  %v490 = vpop.xlane.xlu0 %489
  %v491 = vsel %vm120, %v481, 0.0
  %492 = vadd.xlane.f32.xlu0 %v491
  %v493 = vpop.xlane.xlu0 %492
  %v494 = vmax.f32 %v484, 1e-12
  %v495 = vmax.f32 %v487, 1e-12
  %v496 = vmax.f32 %v490, 1e-12
  %v497 = vmax.f32 %v493, 1e-12
  %v498 = vrsqrt.pop %v494
  %v499 = vrsqrt.pop %v495
  %v500 = vrsqrt.pop %v496
  %v501 = vrsqrt.pop %v497
  %v502 = vmul.f32 %v464, %v498
  %v503 = vmul.f32 %v467, %v499
  %v504 = vmul.f32 %v472, %v500
  %v505 = vmul.f32 %v475, %v501
  %v506 = vld [vmem:[%s3] sm:$0x1]
  %v507 = vsub.f32 %v502, %v18
  %v508 = vsub.f32 %v503, %v19
  %v509 = vsub.f32 %v504, %v20
  %v510 = vsub.f32 %v505, %v21
  %v512 = vlaneseq
  %v513 = vshrl.u32 %v512, 7
  %v514 = vsub.s32 0, %v513
  %v515 = vrot.slane %v506, %v514
  %v517 = vmul.f32 %v515, %v507
  %v518 = vmul.f32 %v515, %v508
  %v519 = vmul.f32 %v515, %v509
  %v520 = vmul.f32 %v515, %v510
  %v521 = vadd.f32 %v18, %v517
  %v522 = vadd.f32 %v19, %v518
  %v523 = vadd.f32 %v20, %v519
  %v524 = vadd.f32 %v21, %v520
  %v525 = vmul.f32 %v521, %v521
  %v526 = vmul.f32 %v522, %v522
  %v527 = vmul.f32 %v523, %v523
  %v528 = vmul.f32 %v524, %v524
  %v529 = vsel %vm120, %v525, 0.0
  %530 = vadd.xlane.f32.xlu0 %v529
  %v531 = vpop.xlane.xlu0 %530
  %v532 = vsel %vm120, %v526, 0.0
  %533 = vadd.xlane.f32.xlu0 %v532
  %v534 = vpop.xlane.xlu0 %533
  %v535 = vsel %vm120, %v527, 0.0
  %536 = vadd.xlane.f32.xlu0 %v535
  %v537 = vpop.xlane.xlu0 %536
  %v538 = vsel %vm120, %v528, 0.0
  %539 = vadd.xlane.f32.xlu0 %v538
  %v540 = vpop.xlane.xlu0 %539
  %v541 = vmax.f32 %v531, 1e-12
  %v542 = vmax.f32 %v534, 1e-12
  %v543 = vmax.f32 %v537, 1e-12
  %v544 = vmax.f32 %v540, 1e-12
  %v545 = vrsqrt.pop %v541
  %v546 = vrsqrt.pop %v542
  %v547 = vrsqrt.pop %v543
  %v548 = vrsqrt.pop %v544
  %v549 = vmul.f32 %v521, %v545
  %v550 = vmul.f32 %v522, %v546
  %v551 = vmul.f32 %v523, %v547
  %v552 = vmul.f32 %v524, %v548
  %553 = vst.msk [vmem:[%s4] sm:$0xff] %vm120, %v549
  %554 = vst.msk [vmem:[%s4 + $0x8] sm:$0xff] %vm120, %v550
  %555 = vst.msk [vmem:[%s4 + $0x10] sm:$0xff] %vm120, %v551
  %556 = vst.msk [vmem:[%s4 + $0x18] sm:$0xff] %vm120, %v552
  // Predicated region
  $region18: #{ngpt_forward.9} parent=0 // pred_check
    _
  $region19: #{ngpt_forward.9} parent=0 // pred_check_branch
    %558 = sbr.rel (0) target = $region21
  $region20: #{ngpt_forward.9} parent=0 // pred_region
    _
  $region21: #{ngpt_forward.9} parent=0 // pred_fallthru
    _
  // Predicated region
  $region22: #{ngpt_forward.9} parent=0 // pred_check
    _
  $region23: #{ngpt_forward.9} parent=0 // pred_check_branch
    %560 = sbr.rel (0) target = $region25
  $region24: #{ngpt_forward.9} parent=0 // pred_region
    _
  $region25: #{ngpt_forward.9} parent=0 // pred_fallthru
    _

// kernel: ngpt_forward.8
$region0: #{ngpt_forward.8}
  #allocation0 [shape = 'u32[]', space=smem, size = 0x4, offset = 0x4, fixed_abs, tag = 'smem constant byte address 0x4 - core index']
  #allocation1 [shape = 'u32[144,128]{1,0:T(1,128)}', space=vmem, size = 0x12000, scoped, tag = 'internal scratch']
  %s0 = inlined_call_operand.vmem [shape: f32[2,16,64], index: 0, kind: input, shape index: {}]
  %s1 = inlined_call_operand.vmem [shape: bf16[2,16,64], index: 1, kind: input, shape index: {}]
  %s2 = inlined_call_operand.vmem [shape: bf16[2,16,128], index: 2, kind: input, shape index: {}]
  %s3 = inlined_call_operand.vmem [shape: bf16[64,64], index: 3, kind: input, shape index: {}]
  %s4 = inlined_call_operand.vmem [shape: f32[1,64], index: 4, kind: input, shape index: {}]
  %s5 = inlined_call_operand.vmem [shape: f32[2,16,64], index: 5, kind: output, shape index: {}]
  %s6 = sld [smem:[#allocation0]]
  $region53: #{ngpt_forward.8} parent=0
    _
  %s8 = ssub.s32 1, %s6
  %s9 = scalar_select 0, %s8, %s6
  loop: start=0, step=1, limit=4
  $region2: #{ngpt_forward.8} parent=0 // loop_pre_header
    _
  $region3: #{ngpt_forward.8} parent=0 // loop_header
    %s11 = sphi 0, %s15
    %p12 = scmp.ge.s32.totalorder %s11, 4
    %s18 = sphi 0, %s30
    %s19 = sphi 0, %s26
    %s20 = sphi 0, %s18
    %s21 = sphi 0, %s19
    %s22 = sphi 0, %s20
    %s23 = sphi 0, %s21
    %s35 = sphi 0, %s37
    %s38 = sphi 0, %s35
    %s39 = sphi 0, %s38
    %s55 = sphi 0, %s39
    %s63 = sphi 0, %s65
    %s66 = sphi 0, %s63
    %s67 = sphi 0, %s66
    %s83 = sphi 0, %s67
    %s89 = sphi 0, %s91
    %s92 = sphi 0, %s89
    %s93 = sphi 0, %s92
    %s109 = sphi 0, %s93
    %s113 = sphi 0, %s113
    %s115 = sphi 0, %s113
    %s116 = sphi 0, %s115
    %s130 = sphi 0, %s116
    %s134 = sphi 0, %s134
    %s136 = sphi 0, %s134
    %s137 = sphi 0, %s136
    %s151 = sphi 0, %s137
    %s159 = sphi 0, %s161
    %s162 = sphi 0, %s159
    %s163 = sphi 0, %s162
    %s179 = sphi 0, %s163
  $region4: #{ngpt_forward.8} parent=0 // loop_header_branch
    %14 = sbr.rel (%p12) target = $region8
  $region5: #{ngpt_forward.8} parent=0 // loop_body
    %s16 = ssub.s32 %s11, 1
    %s17 = ssub.s32 %s11, 2
    %s24 = sadd.s32 1, %s19
    %p25 = scmp.ge.s32.totalorder %s24, 1
    %s26 = scalar_select %p25, 0, %s24
    %s27 = sadd.s32 1, %s18
    %s28 = scalar_select %p25, %s27, %s18
    %p29 = scmp.ge.s32.totalorder %s28, 2
    %s30 = scalar_select %p29, 0, %s28
    %s31 = ssub.s32 %s18, %s30
    %s32 = ssub.s32 %s19, %s26
    %s33 = sor.u32 %s31, %s32
    %p34 = scmp.eq.s32.totalorder %s33, 0
    %s36 = sadd.s32 %s35, 1
    %s37 = scalar_select %p34, %s35, %s36
    %p40 = pneg %p34
    %p41 = scmp.eq.s32.totalorder %s11, 1
    %p42 = por %p40, %p41
    %p43 = scmp.ne.s32.totalorder %s35, %s38
    %p44 = scmp.eq.s32.totalorder %s11, 0
    %p45 = por %p43, %p44
    %p46 = scmp.ne.s32.totalorder %s35, %s38
    %p47 = scmp.eq.s32.totalorder %s16, 1
    %p48 = por %p46, %p47
    %p49 = scmp.ne.s32.totalorder %s38, %s39
    %p50 = scmp.eq.s32.totalorder %s16, 0
    %p51 = por %p49, %p50
    %p52 = scmp.ne.s32.totalorder %s38, %s39
    %p53 = scmp.eq.s32.totalorder %s17, 1
    %p54 = por %p52, %p53
    %p56 = scmp.ne.s32.totalorder %s39, %s55
    %p57 = scmp.eq.s32.totalorder %s17, 0
    %p58 = por %p56, %p57
    %s59 = ssub.s32 %s18, %s30
    %s60 = ssub.s32 %s19, %s26
    %s61 = sor.u32 %s59, %s60
    %p62 = scmp.eq.s32.totalorder %s61, 0
    %s64 = sadd.s32 %s63, 1
    %s65 = scalar_select %p62, %s63, %s64
    %p68 = pneg %p62
    %p69 = scmp.eq.s32.totalorder %s11, 1
    %p70 = por %p68, %p69
    %p71 = scmp.ne.s32.totalorder %s63, %s66
    %p72 = scmp.eq.s32.totalorder %s11, 0
    %p73 = por %p71, %p72
    %p74 = scmp.ne.s32.totalorder %s63, %s66
    %p75 = scmp.eq.s32.totalorder %s16, 1
    %p76 = por %p74, %p75
    %p77 = scmp.ne.s32.totalorder %s66, %s67
    %p78 = scmp.eq.s32.totalorder %s16, 0
    %p79 = por %p77, %p78
    %p80 = scmp.ne.s32.totalorder %s66, %s67
    %p81 = scmp.eq.s32.totalorder %s17, 1
    %p82 = por %p80, %p81
    %p84 = scmp.ne.s32.totalorder %s67, %s83
    %p85 = scmp.eq.s32.totalorder %s17, 0
    %p86 = por %p84, %p85
    %s87 = ssub.s32 %s18, %s30
    %p88 = scmp.eq.s32.totalorder %s87, 0
    %s90 = sadd.s32 %s89, 1
    %s91 = scalar_select %p88, %s89, %s90
    %p94 = pneg %p88
    %p95 = scmp.eq.s32.totalorder %s11, 1
    %p96 = por %p94, %p95
    %p97 = scmp.ne.s32.totalorder %s89, %s92
    %p98 = scmp.eq.s32.totalorder %s11, 0
    %p99 = por %p97, %p98
    %p100 = scmp.ne.s32.totalorder %s89, %s92
    %p101 = scmp.eq.s32.totalorder %s16, 1
    %p102 = por %p100, %p101
    %p103 = scmp.ne.s32.totalorder %s92, %s93
    %p104 = scmp.eq.s32.totalorder %s16, 0
    %p105 = por %p103, %p104
    %p106 = scmp.ne.s32.totalorder %s92, %s93
    %p107 = scmp.eq.s32.totalorder %s17, 1
    %p108 = por %p106, %p107
    %p110 = scmp.ne.s32.totalorder %s93, %s109
    %p111 = scmp.eq.s32.totalorder %s17, 0
    %p112 = por %p110, %p111
    %s114 = sadd.s32 %s113, 1
    %p117 = scmp.eq.s32.totalorder %s11, 1
    %p118 = scmp.ne.s32.totalorder %s113, %s115
    %p119 = scmp.eq.s32.totalorder %s11, 0
    %p120 = por %p118, %p119
    %p121 = scmp.ne.s32.totalorder %s113, %s115
    %p122 = scmp.eq.s32.totalorder %s16, 1
    %p123 = por %p121, %p122
    %p124 = scmp.ne.s32.totalorder %s115, %s116
    %p125 = scmp.eq.s32.totalorder %s16, 0
    %p126 = por %p124, %p125
    %p127 = scmp.ne.s32.totalorder %s115, %s116
    %p128 = scmp.eq.s32.totalorder %s17, 1
    %p129 = por %p127, %p128
    %p131 = scmp.ne.s32.totalorder %s116, %s130
    %p132 = scmp.eq.s32.totalorder %s17, 0
    %p133 = por %p131, %p132
    %s135 = sadd.s32 %s134, 1
    %p138 = scmp.eq.s32.totalorder %s11, 1
    %p139 = scmp.ne.s32.totalorder %s134, %s136
    %p140 = scmp.eq.s32.totalorder %s11, 0
    %p141 = por %p139, %p140
    %p142 = scmp.ne.s32.totalorder %s134, %s136
    %p143 = scmp.eq.s32.totalorder %s16, 1
    %p144 = por %p142, %p143
    %p145 = scmp.ne.s32.totalorder %s136, %s137
    %p146 = scmp.eq.s32.totalorder %s16, 0
    %p147 = por %p145, %p146
    %p148 = scmp.ne.s32.totalorder %s136, %s137
    %p149 = scmp.eq.s32.totalorder %s17, 1
    %p150 = por %p148, %p149
    %p152 = scmp.ne.s32.totalorder %s137, %s151
    %p153 = scmp.eq.s32.totalorder %s17, 0
    %p154 = por %p152, %p153
    %s155 = ssub.s32 %s18, %s30
    %s156 = ssub.s32 %s19, %s26
    %s157 = sor.u32 %s155, %s156
    %p158 = scmp.eq.s32.totalorder %s157, 0
    %s160 = sadd.s32 %s159, 1
    %s161 = scalar_select %p158, %s159, %s160
    %p164 = pneg %p158
    %p165 = scmp.eq.s32.totalorder %s11, 1
    %p166 = por %p164, %p165
    %p167 = scmp.ne.s32.totalorder %s159, %s162
    %p168 = scmp.eq.s32.totalorder %s11, 0
    %p169 = por %p167, %p168
    %p170 = scmp.ne.s32.totalorder %s159, %s162
    %p171 = scmp.eq.s32.totalorder %s16, 1
    %p172 = por %p170, %p171
    %p173 = scmp.ne.s32.totalorder %s162, %s163
    %p174 = scmp.eq.s32.totalorder %s16, 0
    %p175 = por %p173, %p174
    %p176 = scmp.ne.s32.totalorder %s162, %s163
    %p177 = scmp.eq.s32.totalorder %s17, 1
    %p178 = por %p176, %p177
    %p180 = scmp.ne.s32.totalorder %s163, %s179
    %p181 = scmp.eq.s32.totalorder %s17, 0
    %p182 = por %p180, %p181
    %p183 = scmp.le.s32.totalorder 1, %s11
    %p184 = scmp.lt.s32.totalorder %s11, 3
    %p185 = pnand %p183, %p184
    %p186 = pneg %p185
    // Predicated region
    $region9: #{ngpt_forward.8} parent=5 // pred_check
      _
    $region10: #{ngpt_forward.8} parent=5 // pred_check_branch
      %188 = sbr.rel (%p185) target = $region12
    $region11: #{ngpt_forward.8} parent=5 // pred_region
      %s189 = ssub.s32 %s11, 1
      // Predicated region
      $region13: #{ngpt_forward.8} parent=11 // pred_check
        %p190 = pneg %p126
      $region14: #{ngpt_forward.8} parent=11 // pred_check_branch
        %192 = sbr.rel (%p190) target = $region16
      $region15: #{ngpt_forward.8} parent=11 // pred_region
        _
      $region16: #{ngpt_forward.8} parent=11 // pred_fallthru
        _
      // Predicated region
      $region17: #{ngpt_forward.8} parent=11 // pred_check
        %p193 = pneg %p147
      $region18: #{ngpt_forward.8} parent=11 // pred_check_branch
        %195 = sbr.rel (%p193) target = $region20
      $region19: #{ngpt_forward.8} parent=11 // pred_region
        _
      $region20: #{ngpt_forward.8} parent=11 // pred_fallthru
        _
    $region12: #{ngpt_forward.8} parent=5 // pred_fallthru
      _
    %p196 = scmp.lt.s32.totalorder %s11, 2
    // Predicated region
    $region21: #{ngpt_forward.8} parent=5 // pred_check
      %p197 = pneg %p196
    $region22: #{ngpt_forward.8} parent=5 // pred_check_branch
      %199 = sbr.rel (%p197) target = $region24
    $region23: #{ngpt_forward.8} parent=5 // pred_region
      // Predicated region
      $region25: #{ngpt_forward.8} parent=23 // pred_check
        %p200 = pneg %p45
      $region26: #{ngpt_forward.8} parent=23 // pred_check_branch
        %202 = sbr.rel (%p200) target = $region28
      $region27: #{ngpt_forward.8} parent=23 // pred_region
        %s203 = smul.u32 2, %s19
        %p204 = scmp.lt.s32.totalorder %s18, 1
        %s205 = scalar_select %p204, %s18, 1
        %p206 = scmp.lt.s32.totalorder %s203, 1
        %s207 = scalar_select %p206, %s203, 1
        %s208 = smul.addr %s205, 2
        %s209 = sadd.s32 %s207, %s208
        %s210 = smul.addr %s209, 8
        %s211 = scalar_lea.vmem %s0, %s210
        %s212 = smul.u32 2, %s19
      $region28: #{ngpt_forward.8} parent=23 // pred_fallthru
        _
      // Predicated region
      $region29: #{ngpt_forward.8} parent=23 // pred_check
        %p213 = pneg %p73
      $region30: #{ngpt_forward.8} parent=23 // pred_check_branch
        %215 = sbr.rel (%p213) target = $region32
      $region31: #{ngpt_forward.8} parent=23 // pred_region
        %s216 = smul.u32 2, %s19
        %p217 = scmp.lt.s32.totalorder %s18, 1
        %s218 = scalar_select %p217, %s18, 1
        %p219 = scmp.lt.s32.totalorder %s216, 1
        %s220 = scalar_select %p219, %s216, 1
        %s221 = smul.addr %s218, 2
        %s222 = sadd.s32 %s220, %s221
        %s223 = smul.addr %s222, 4
        %s224 = scalar_lea.vmem %s1, %s223
        %s225 = smul.u32 2, %s19
      $region32: #{ngpt_forward.8} parent=23 // pred_fallthru
        _
      // Predicated region
      $region33: #{ngpt_forward.8} parent=23 // pred_check
        %p226 = pneg %p99
      $region34: #{ngpt_forward.8} parent=23 // pred_check_branch
        %228 = sbr.rel (%p226) target = $region36
      $region35: #{ngpt_forward.8} parent=23 // pred_region
        %p229 = scmp.lt.s32.totalorder %s18, 1
        %s230 = scalar_select %p229, %s18, 1
        %s231 = smul.addr %s230, 2
        %s232 = smul.addr %s231, 4
        %s233 = scalar_lea.vmem %s2, %s232
      $region36: #{ngpt_forward.8} parent=23 // pred_fallthru
        _
    $region24: #{ngpt_forward.8} parent=5 // pred_fallthru
      _
    %p234 = scmp.le.s32.totalorder 1, %s11
    %p235 = scmp.lt.s32.totalorder %s11, 3
    %p236 = pnand %p234, %p235
    %p237 = pneg %p236
    // Predicated region
    $region37: #{ngpt_forward.8} parent=5 // pred_check
      _
    $region38: #{ngpt_forward.8} parent=5 // pred_check_branch
      %239 = sbr.rel (%p236) target = $region40
    $region39: #{ngpt_forward.8} parent=5 // pred_region
      %s240 = ssub.s32 %s11, 1
      %s241 = smul.u32 2, %s21
      %p242 = scmp.lt.s32.totalorder %s20, 1
      %s243 = scalar_select %p242, %s20, 1
      %p244 = scmp.lt.s32.totalorder %s241, 1
      %s245 = scalar_select %p244, %s241, 1
      %s246 = smul.addr %s243, 2
      %s247 = sadd.s32 %s245, %s246
      %s248 = smul.addr %s247, 8
      %s249 = scalar_lea.vmem %s0, %s248
      %p250 = pneg %p51
      %p251 = pneg %p48
      %s252 = smul.u32 2, %s21
      %p253 = scmp.lt.s32.totalorder %s20, 1
      %s254 = scalar_select %p253, %s20, 1
      %p255 = scmp.lt.s32.totalorder %s252, 1
      %s256 = scalar_select %p255, %s252, 1
      %s257 = smul.addr %s254, 2
      %s258 = sadd.s32 %s256, %s257
      %s259 = smul.addr %s258, 4
      %s260 = scalar_lea.vmem %s1, %s259
      %p261 = pneg %p79
      %p262 = pneg %p76
      %p263 = scmp.lt.s32.totalorder %s20, 1
      %s264 = scalar_select %p263, %s20, 1
      %s265 = smul.addr %s264, 2
      %s266 = smul.addr %s265, 4
      %s267 = scalar_lea.vmem %s2, %s266
      %p268 = pneg %p105
      %p269 = pneg %p102
      %p270 = pneg %p126
      %p271 = pneg %p123
      %p272 = pneg %p147
      %p273 = pneg %p144
      %p274 = pneg %p175
      %p275 = pneg %p172
      %s276 = smul.u32 2, %s21
      %p277 = scmp.lt.s32.totalorder %s20, 1
      %s278 = scalar_select %p277, %s20, 1
      %p279 = scmp.lt.s32.totalorder %s276, 1
      %s280 = scalar_select %p279, %s276, 1
      %s281 = smul.addr %s278, 2
      %s282 = sadd.s32 %s280, %s281
      %s283 = smul.addr %s282, 8
      %s284 = scalar_lea.vmem %s5, %s283
      %s285 = smul.u32 2, %s21
      %p286 = scmp.lt.s32.totalorder %s20, 1
      %s287 = scalar_select %p286, %s20, 1
      %p288 = scmp.lt.s32.totalorder %s285, 1
      %s289 = scalar_select %p288, %s285, 1
      %s290 = smul.addr %s287, 2
      %s291 = sadd.s32 %s289, %s290
      %s292 = smul.addr %s291, 8
      %s293 = scalar_lea.vmem %s0, %s292
      %s294 = smul.u32 2, %s21
      %s295 = smul.u32 2, %s21
      %p296 = scmp.lt.s32.totalorder %s20, 1
      %s297 = scalar_select %p296, %s20, 1
      %p298 = scmp.lt.s32.totalorder %s295, 1
      %s299 = scalar_select %p298, %s295, 1
      %s300 = smul.addr %s297, 2
      %s301 = sadd.s32 %s299, %s300
      %s302 = smul.addr %s301, 4
      %s303 = scalar_lea.vmem %s1, %s302
      %s304 = smul.u32 2, %s21
      %p305 = scmp.lt.s32.totalorder %s20, 1
      %s306 = scalar_select %p305, %s20, 1
      %s307 = smul.addr %s306, 2
      %s308 = smul.addr %s307, 4
      %s309 = scalar_lea.vmem %s2, %s308
      %s310 = smul.u32 2, %s21
      %p311 = scmp.lt.s32.totalorder %s20, 1
      %s312 = scalar_select %p311, %s20, 1
      %p313 = scmp.lt.s32.totalorder %s310, 1
      %s314 = scalar_select %p313, %s310, 1
      %s315 = smul.addr %s312, 2
      %s316 = sadd.s32 %s314, %s315
      %s317 = smul.addr %s316, 8
      %s318 = scalar_lea.vmem %s5, %s317
      %s319 = smul.u32 2, %s21
      %v321 = vld [vmem:[%s293] sm:$0xff]
      %v322 = vld [vmem:[%s293 + $0x8] sm:$0xff]
      %v323 = vld [vmem:[%s303] sm:$0xf]
      %v324 = vld [vmem:[%s303 + $0x4] sm:$0xf]
      %v325 = vld [vmem:[%s309] sm:$0xf]
      %v326 = vld [vmem:[%s309 + $0x4] sm:$0xf]
      %s327 = smul.u32 %s21, 16
      %v328 = vlaneseq
      %v329 = vshrl.u32 %v328, 7
      %v330 = vadd.s32 %v329, 8
      %v331 = vstv %s327
      %v332 = vadd.s32 %v329, %v331
      %v333 = vadd.s32 %v330, %v331
      %v334 = vlaneseq
      %v335 = vand.u32 %v334, 127
      %vm336 = vcmp.ge.s32.totalorder %v332, %v335
      %vm337 = vcmp.ge.s32.totalorder %v333, %v335
      %v340 = vunpack.c.l.b16 %v323
      %v341 = vunpack.c.l.b16 %v324
      %v342 = vpack.c.b16 %v341, %v340
      %v345 = vunpack.c.l.b16 %v325
      %v346 = vunpack.c.l.b16 %v326
      %v347 = vpack.c.b16 %v346, %v345
      %vm348 = vcmask 130048
      %v350 = vsel %vm348, %v342, 0
      %v353 = vsel %vm348, %v347, 0
      %355 = vmatprep.subr.bf16.mxu0 0
      %356 = vmatpush1.bf16.xpose.msra.mxu0 %v353
      %357 = vmatprep.subr.bf16.mxu0 0
      %358 = vmatpush1.bf16.xpose.msra.mxu0 0
      %359 = vmatprep.subr.bf16.mxu0 0
      %360 = vmatpush1.bf16.xpose.msra.mxu0 0
      %361 = vmatprep.subr.bf16.mxu0 0
      %362 = vmatpush1.bf16.xpose.msra.mxu0 0
      %363 = vmatprep.subr.bf16.mxu0 0
      %364 = vmatpush1.bf16.xpose.msra.mxu0 0
      %365 = vmatprep.subr.bf16.mxu0 0
      %366 = vmatpush1.bf16.xpose.msra.mxu0 0
      %367 = vmatprep.subr.bf16.mxu0 0
      %368 = vmatpush1.bf16.xpose.msra.mxu0 0
      %369 = vmatprep.subr.bf16.mxu0 0
      %370 = vmatpush1.bf16.xpose.msra.mxu0 0
      %371 = vmatprep.subr.bf16.mxu0 0
      %372 = vmatpush1.bf16.xpose.msra.mxu0 0
      %373 = vmatprep.subr.bf16.mxu0 0
      %374 = vmatpush1.bf16.xpose.msra.mxu0 0
      %375 = vmatprep.subr.bf16.mxu0 0
      %376 = vmatpush1.bf16.xpose.msra.mxu0 0
      %377 = vmatprep.subr.bf16.mxu0 0
      %378 = vmatpush1.bf16.xpose.msra.mxu0 0
      %379 = vmatprep.subr.bf16.mxu0 0
      %380 = vmatpush1.bf16.xpose.msra.mxu0 0
      %381 = vmatprep.subr.bf16.mxu0 0
      %382 = vmatpush1.bf16.xpose.msra.mxu0 0
      %383 = vmatprep.subr.bf16.mxu0 0
      %384 = vmatpush1.bf16.xpose.msra.mxu0 0
      %385 = vmatprep.subr.bf16.mxu0 0
      %386 = vmatpush1.bf16.xpose.msra.mxu0 0
      %387 = vmatprep.mubr.bf16.mxu0 0
      %388 = vmatmul.mubr.bf16.gmra.mrb[0].mxu0 %v350
      %v389 = vpop.f32.mrb[0].mxu0
      %v390 = vadd.f32 0.0, %v389
      %v391 = vpop.f32.mrb[0].mxu0
      %v392 = vpop.f32.mrb[0].mxu0
      %v393 = vadd.f32 0.0, %v392
      %v394 = vpop.f32.mrb[0].mxu0
      %395 = vdwg.mxu0
      %v396 = vmul.f32 %v390, 0.25
      %v397 = vmul.f32 %v393, 0.25
      %v398 = vsel %vm336, %v396, -1e+30
      %v399 = vsel %vm337, %v397, -1e+30
      %v400 = vsel %vm348, %v398, -inf
      %401 = vmax.xlane.f32.xlu0 %v400
      %v402 = vpop.xlane.xlu0 %401
      %v403 = vsel %vm348, %v399, -inf
      %404 = vmax.xlane.f32.xlu0 %v403
      %v405 = vpop.xlane.xlu0 %404
      %v406 = vsub.f32 %v398, %v402
      %v407 = vsub.f32 %v399, %v405
      %v408 = vmul.f32 %v406, 1.442695
      %v409 = vpow.pop %v408
      %v410 = vmul.f32 %v407, 1.442695
      %v411 = vpow.pop %v410
      %v412 = vsel %vm348, %v409, 0.0
      %413 = vadd.xlane.f32.xlu0 %v412
      %v414 = vpop.xlane.xlu0 %413
      %v415 = vsel %vm348, %v411, 0.0
      %416 = vadd.xlane.f32.xlu0 %v415
      %v417 = vpop.xlane.xlu0 %416
      %v418 = vrcp.pop %v414
      %v419 = vrcp.pop %v417
      %v420 = vmul.f32 %v409, %v418
      %v421 = vmul.f32 %v411, %v419
      %v422 = vpack.c.bf16 %v421, %v420
      %423 = vrot.lane.b32.xlu0 %v347, 64
      %v424 = vpop.permute.xlu0 %423
      %v427 = vsel %vm348, %v422, 0
      %429 = vmatprep.subr.bf16.mxu0 0
      %430 = vmatpush1.bf16.msra.mxu0 %v424
      %431 = vmatprep.subr.bf16.mxu0 0
      %432 = vmatpush1.bf16.msra.mxu0 0
      %433 = vmatprep.subr.bf16.mxu0 0
      %434 = vmatpush1.bf16.msra.mxu0 0
      %435 = vmatprep.subr.bf16.mxu0 0
      %436 = vmatpush1.bf16.msra.mxu0 0
      %437 = vmatprep.subr.bf16.mxu0 0
      %438 = vmatpush1.bf16.msra.mxu0 0
      %439 = vmatprep.subr.bf16.mxu0 0
      %440 = vmatpush1.bf16.msra.mxu0 0
      %441 = vmatprep.subr.bf16.mxu0 0
      %442 = vmatpush1.bf16.msra.mxu0 0
      %443 = vmatprep.subr.bf16.mxu0 0
      %444 = vmatpush1.bf16.msra.mxu0 0
      %445 = vmatprep.subr.bf16.mxu0 0
      %446 = vmatpush1.bf16.msra.mxu0 0
      %447 = vmatprep.subr.bf16.mxu0 0
      %448 = vmatpush1.bf16.msra.mxu0 0
      %449 = vmatprep.subr.bf16.mxu0 0
      %450 = vmatpush1.bf16.msra.mxu0 0
      %451 = vmatprep.subr.bf16.mxu0 0
      %452 = vmatpush1.bf16.msra.mxu0 0
      %453 = vmatprep.subr.bf16.mxu0 0
      %454 = vmatpush1.bf16.msra.mxu0 0
      %455 = vmatprep.subr.bf16.mxu0 0
      %456 = vmatpush1.bf16.msra.mxu0 0
      %457 = vmatprep.subr.bf16.mxu0 0
      %458 = vmatpush1.bf16.msra.mxu0 0
      %459 = vmatprep.subr.bf16.mxu0 0
      %460 = vmatpush1.bf16.msra.mxu0 0
      %461 = vmatprep.mubr.bf16.mxu0 0
      %462 = vmatmul.mubr.bf16.gmra.mrb[0].mxu0 %v427
      %v463 = vpop.f32.mrb[0].mxu0
      %v464 = vadd.f32 0.0, %v463
      %v465 = vpop.f32.mrb[0].mxu0
      %v466 = vpop.f32.mrb[0].mxu0
      %v467 = vadd.f32 0.0, %v466
      %v468 = vpop.f32.mrb[0].mxu0
      %469 = vdwg.mxu0
      %470 = vrot.lane.b32.xlu0 %v342, 112
      %v471 = vpop.permute.xlu0 %470
      %472 = vrot.lane.b32.xlu0 %v347, 112
      %v473 = vpop.permute.xlu0 %472
      %v475 = vsel %vm348, %v471, 0
      %v478 = vsel %vm348, %v473, 0
      %480 = vmatprep.subr.bf16.mxu0 0
      %481 = vmatpush1.bf16.xpose.msra.mxu0 %v478
      %482 = vmatprep.subr.bf16.mxu0 0
      %483 = vmatpush1.bf16.xpose.msra.mxu0 0
      %484 = vmatprep.subr.bf16.mxu0 0
      %485 = vmatpush1.bf16.xpose.msra.mxu0 0
      %486 = vmatprep.subr.bf16.mxu0 0
      %487 = vmatpush1.bf16.xpose.msra.mxu0 0
      %488 = vmatprep.subr.bf16.mxu0 0
      %489 = vmatpush1.bf16.xpose.msra.mxu0 0
      %490 = vmatprep.subr.bf16.mxu0 0
      %491 = vmatpush1.bf16.xpose.msra.mxu0 0
      %492 = vmatprep.subr.bf16.mxu0 0
      %493 = vmatpush1.bf16.xpose.msra.mxu0 0
      %494 = vmatprep.subr.bf16.mxu0 0
      %495 = vmatpush1.bf16.xpose.msra.mxu0 0
      %496 = vmatprep.subr.bf16.mxu0 0
      %497 = vmatpush1.bf16.xpose.msra.mxu0 0
      %498 = vmatprep.subr.bf16.mxu0 0
      %499 = vmatpush1.bf16.xpose.msra.mxu0 0
      %500 = vmatprep.subr.bf16.mxu0 0
      %501 = vmatpush1.bf16.xpose.msra.mxu0 0
      %502 = vmatprep.subr.bf16.mxu0 0
      %503 = vmatpush1.bf16.xpose.msra.mxu0 0
      %504 = vmatprep.subr.bf16.mxu0 0
      %505 = vmatpush1.bf16.xpose.msra.mxu0 0
      %506 = vmatprep.subr.bf16.mxu0 0
      %507 = vmatpush1.bf16.xpose.msra.mxu0 0
      %508 = vmatprep.subr.bf16.mxu0 0
      %509 = vmatpush1.bf16.xpose.msra.mxu0 0
      %510 = vmatprep.subr.bf16.mxu0 0
      %511 = vmatpush1.bf16.xpose.msra.mxu0 0
      %512 = vmatprep.mubr.bf16.mxu0 0
      %513 = vmatmul.mubr.bf16.gmra.mrb[0].mxu0 %v475
      %v514 = vpop.f32.mrb[0].mxu0
      %v515 = vadd.f32 0.0, %v514
      %v516 = vpop.f32.mrb[0].mxu0
      %v517 = vpop.f32.mrb[0].mxu0
      %v518 = vadd.f32 0.0, %v517
      %v519 = vpop.f32.mrb[0].mxu0
      %520 = vdwg.mxu0
      %v521 = vmul.f32 %v515, 0.25
      %v522 = vmul.f32 %v518, 0.25
      %v523 = vsel %vm336, %v521, -1e+30
      %v524 = vsel %vm337, %v522, -1e+30
      %v525 = vsel %vm348, %v523, -inf
      %526 = vmax.xlane.f32.xlu0 %v525
      %v527 = vpop.xlane.xlu0 %526
      %v528 = vsel %vm348, %v524, -inf
      %529 = vmax.xlane.f32.xlu0 %v528
      %v530 = vpop.xlane.xlu0 %529
      %v531 = vsub.f32 %v523, %v527
      %v532 = vsub.f32 %v524, %v530
      %v533 = vmul.f32 %v531, 1.442695
      %v534 = vpow.pop %v533
      %v535 = vmul.f32 %v532, 1.442695
      %v536 = vpow.pop %v535
      %v537 = vsel %vm348, %v534, 0.0
      %538 = vadd.xlane.f32.xlu0 %v537
      %v539 = vpop.xlane.xlu0 %538
      %v540 = vsel %vm348, %v536, 0.0
      %541 = vadd.xlane.f32.xlu0 %v540
      %v542 = vpop.xlane.xlu0 %541
      %v543 = vrcp.pop %v539
      %v544 = vrcp.pop %v542
      %v545 = vmul.f32 %v534, %v543
      %v546 = vmul.f32 %v536, %v544
      %v547 = vpack.c.bf16 %v546, %v545
      %548 = vrot.lane.b32.xlu0 %v347, 48
      %v549 = vpop.permute.xlu0 %548
      %v552 = vsel %vm348, %v547, 0
      %554 = vmatprep.subr.bf16.mxu0 0
      %555 = vmatpush1.bf16.msra.mxu0 %v549
      %556 = vmatprep.subr.bf16.mxu0 0
      %557 = vmatpush1.bf16.msra.mxu0 0
      %558 = vmatprep.subr.bf16.mxu0 0
      %559 = vmatpush1.bf16.msra.mxu0 0
      %560 = vmatprep.subr.bf16.mxu0 0
      %561 = vmatpush1.bf16.msra.mxu0 0
      %562 = vmatprep.subr.bf16.mxu0 0
      %563 = vmatpush1.bf16.msra.mxu0 0
      %564 = vmatprep.subr.bf16.mxu0 0
      %565 = vmatpush1.bf16.msra.mxu0 0
      %566 = vmatprep.subr.bf16.mxu0 0
      %567 = vmatpush1.bf16.msra.mxu0 0
      %568 = vmatprep.subr.bf16.mxu0 0
      %569 = vmatpush1.bf16.msra.mxu0 0
      %570 = vmatprep.subr.bf16.mxu0 0
      %571 = vmatpush1.bf16.msra.mxu0 0
      %572 = vmatprep.subr.bf16.mxu0 0
      %573 = vmatpush1.bf16.msra.mxu0 0
      %574 = vmatprep.subr.bf16.mxu0 0
      %575 = vmatpush1.bf16.msra.mxu0 0
      %576 = vmatprep.subr.bf16.mxu0 0
      %577 = vmatpush1.bf16.msra.mxu0 0
      %578 = vmatprep.subr.bf16.mxu0 0
      %579 = vmatpush1.bf16.msra.mxu0 0
      %580 = vmatprep.subr.bf16.mxu0 0
      %581 = vmatpush1.bf16.msra.mxu0 0
      %582 = vmatprep.subr.bf16.mxu0 0
      %583 = vmatpush1.bf16.msra.mxu0 0
      %584 = vmatprep.subr.bf16.mxu0 0
      %585 = vmatpush1.bf16.msra.mxu0 0
      %586 = vmatprep.mubr.bf16.mxu0 0
      %587 = vmatmul.mubr.bf16.gmra.mrb[0].mxu0 %v552
      %v588 = vpop.f32.mrb[0].mxu0
      %v589 = vadd.f32 0.0, %v588
      %v590 = vpop.f32.mrb[0].mxu0
      %v591 = vpop.f32.mrb[0].mxu0
      %v592 = vadd.f32 0.0, %v591
      %v593 = vpop.f32.mrb[0].mxu0
      %594 = vdwg.mxu0
      %595 = vrot.lane.b32.xlu0 %v342, 96
      %v596 = vpop.permute.xlu0 %595
      %597 = vrot.lane.b32.xlu0 %v347, 96
      %v598 = vpop.permute.xlu0 %597
      %v600 = vsel %vm348, %v596, 0
      %v603 = vsel %vm348, %v598, 0
      %605 = vmatprep.subr.bf16.mxu0 0
      %606 = vmatpush1.bf16.xpose.msra.mxu0 %v603
      %607 = vmatprep.subr.bf16.mxu0 0
      %608 = vmatpush1.bf16.xpose.msra.mxu0 0
      %609 = vmatprep.subr.bf16.mxu0 0
      %610 = vmatpush1.bf16.xpose.msra.mxu0 0
      %611 = vmatprep.subr.bf16.mxu0 0
      %612 = vmatpush1.bf16.xpose.msra.mxu0 0
      %613 = vmatprep.subr.bf16.mxu0 0
      %614 = vmatpush1.bf16.xpose.msra.mxu0 0
      %615 = vmatprep.subr.bf16.mxu0 0
      %616 = vmatpush1.bf16.xpose.msra.mxu0 0
      %617 = vmatprep.subr.bf16.mxu0 0
      %618 = vmatpush1.bf16.xpose.msra.mxu0 0
      %619 = vmatprep.subr.bf16.mxu0 0
      %620 = vmatpush1.bf16.xpose.msra.mxu0 0
      %621 = vmatprep.subr.bf16.mxu0 0
      %622 = vmatpush1.bf16.xpose.msra.mxu0 0
      %623 = vmatprep.subr.bf16.mxu0 0
      %624 = vmatpush1.bf16.xpose.msra.mxu0 0
      %625 = vmatprep.subr.bf16.mxu0 0
      %626 = vmatpush1.bf16.xpose.msra.mxu0 0
      %627 = vmatprep.subr.bf16.mxu0 0
      %628 = vmatpush1.bf16.xpose.msra.mxu0 0
      %629 = vmatprep.subr.bf16.mxu0 0
      %630 = vmatpush1.bf16.xpose.msra.mxu0 0
      %631 = vmatprep.subr.bf16.mxu0 0
      %632 = vmatpush1.bf16.xpose.msra.mxu0 0
      %633 = vmatprep.subr.bf16.mxu0 0
      %634 = vmatpush1.bf16.xpose.msra.mxu0 0
      %635 = vmatprep.subr.bf16.mxu0 0
      %636 = vmatpush1.bf16.xpose.msra.mxu0 0
      %637 = vmatprep.mubr.bf16.mxu0 0
      %638 = vmatmul.mubr.bf16.gmra.mrb[0].mxu0 %v600
      %v639 = vpop.f32.mrb[0].mxu0
      %v640 = vadd.f32 0.0, %v639
      %v641 = vpop.f32.mrb[0].mxu0
      %v642 = vpop.f32.mrb[0].mxu0
      %v643 = vadd.f32 0.0, %v642
      %v644 = vpop.f32.mrb[0].mxu0
      %645 = vdwg.mxu0
      %v646 = vmul.f32 %v640, 0.25
      %v647 = vmul.f32 %v643, 0.25
      %v648 = vsel %vm336, %v646, -1e+30
      %v649 = vsel %vm337, %v647, -1e+30
      %v650 = vsel %vm348, %v648, -inf
      %651 = vmax.xlane.f32.xlu0 %v650
      %v652 = vpop.xlane.xlu0 %651
      %v653 = vsel %vm348, %v649, -inf
      %654 = vmax.xlane.f32.xlu0 %v653
      %v655 = vpop.xlane.xlu0 %654
      %v656 = vsub.f32 %v648, %v652
      %v657 = vsub.f32 %v649, %v655
      %v658 = vmul.f32 %v656, 1.442695
      %v659 = vpow.pop %v658
      %v660 = vmul.f32 %v657, 1.442695
      %v661 = vpow.pop %v660
      %v662 = vsel %vm348, %v659, 0.0
      %663 = vadd.xlane.f32.xlu0 %v662
      %v664 = vpop.xlane.xlu0 %663
      %v665 = vsel %vm348, %v661, 0.0
      %666 = vadd.xlane.f32.xlu0 %v665
      %v667 = vpop.xlane.xlu0 %666
      %v668 = vrcp.pop %v664
      %v669 = vrcp.pop %v667
      %v670 = vmul.f32 %v659, %v668
      %v671 = vmul.f32 %v661, %v669
      %v672 = vpack.c.bf16 %v671, %v670
      %673 = vrot.lane.b32.xlu0 %v347, 32
      %v674 = vpop.permute.xlu0 %673
      %v677 = vsel %vm348, %v672, 0
      %679 = vmatprep.subr.bf16.mxu0 0
      %680 = vmatpush1.bf16.msra.mxu0 %v674
      %681 = vmatprep.subr.bf16.mxu0 0
      %682 = vmatpush1.bf16.msra.mxu0 0
      %683 = vmatprep.subr.bf16.mxu0 0
      %684 = vmatpush1.bf16.msra.mxu0 0
      %685 = vmatprep.subr.bf16.mxu0 0
      %686 = vmatpush1.bf16.msra.mxu0 0
      %687 = vmatprep.subr.bf16.mxu0 0
      %688 = vmatpush1.bf16.msra.mxu0 0
      %689 = vmatprep.subr.bf16.mxu0 0
      %690 = vmatpush1.bf16.msra.mxu0 0
      %691 = vmatprep.subr.bf16.mxu0 0
      %692 = vmatpush1.bf16.msra.mxu0 0
      %693 = vmatprep.subr.bf16.mxu0 0
      %694 = vmatpush1.bf16.msra.mxu0 0
      %695 = vmatprep.subr.bf16.mxu0 0
      %696 = vmatpush1.bf16.msra.mxu0 0
      %697 = vmatprep.subr.bf16.mxu0 0
      %698 = vmatpush1.bf16.msra.mxu0 0
      %699 = vmatprep.subr.bf16.mxu0 0
      %700 = vmatpush1.bf16.msra.mxu0 0
      %701 = vmatprep.subr.bf16.mxu0 0
      %702 = vmatpush1.bf16.msra.mxu0 0
      %703 = vmatprep.subr.bf16.mxu0 0
      %704 = vmatpush1.bf16.msra.mxu0 0
      %705 = vmatprep.subr.bf16.mxu0 0
      %706 = vmatpush1.bf16.msra.mxu0 0
      %707 = vmatprep.subr.bf16.mxu0 0
      %708 = vmatpush1.bf16.msra.mxu0 0
      %709 = vmatprep.subr.bf16.mxu0 0
      %710 = vmatpush1.bf16.msra.mxu0 0
      %711 = vmatprep.mubr.bf16.mxu0 0
      %712 = vmatmul.mubr.bf16.gmra.mrb[0].mxu0 %v677
      %v713 = vpop.f32.mrb[0].mxu0
      %v714 = vadd.f32 0.0, %v713
      %v715 = vpop.f32.mrb[0].mxu0
      %v716 = vpop.f32.mrb[0].mxu0
      %v717 = vadd.f32 0.0, %v716
      %v718 = vpop.f32.mrb[0].mxu0
      %719 = vdwg.mxu0
      %720 = vrot.lane.b32.xlu0 %v342, 80
      %v721 = vpop.permute.xlu0 %720
      %722 = vrot.lane.b32.xlu0 %v347, 80
      %v723 = vpop.permute.xlu0 %722
      %v725 = vsel %vm348, %v721, 0
      %v728 = vsel %vm348, %v723, 0
      %730 = vmatprep.subr.bf16.mxu0 0
      %731 = vmatpush1.bf16.xpose.msra.mxu0 %v728
      %732 = vmatprep.subr.bf16.mxu0 0
      %733 = vmatpush1.bf16.xpose.msra.mxu0 0
      %734 = vmatprep.subr.bf16.mxu0 0
      %735 = vmatpush1.bf16.xpose.msra.mxu0 0
      %736 = vmatprep.subr.bf16.mxu0 0
      %737 = vmatpush1.bf16.xpose.msra.mxu0 0
      %738 = vmatprep.subr.bf16.mxu0 0
      %739 = vmatpush1.bf16.xpose.msra.mxu0 0
      %740 = vmatprep.subr.bf16.mxu0 0
      %741 = vmatpush1.bf16.xpose.msra.mxu0 0
      %742 = vmatprep.subr.bf16.mxu0 0
      %743 = vmatpush1.bf16.xpose.msra.mxu0 0
      %744 = vmatprep.subr.bf16.mxu0 0
      %745 = vmatpush1.bf16.xpose.msra.mxu0 0
      %746 = vmatprep.subr.bf16.mxu0 0
      %747 = vmatpush1.bf16.xpose.msra.mxu0 0
      %748 = vmatprep.subr.bf16.mxu0 0
      %749 = vmatpush1.bf16.xpose.msra.mxu0 0
      %750 = vmatprep.subr.bf16.mxu0 0
      %751 = vmatpush1.bf16.xpose.msra.mxu0 0
      %752 = vmatprep.subr.bf16.mxu0 0
      %753 = vmatpush1.bf16.xpose.msra.mxu0 0
      %754 = vmatprep.subr.bf16.mxu0 0
      %755 = vmatpush1.bf16.xpose.msra.mxu0 0
      %756 = vmatprep.subr.bf16.mxu0 0
      %757 = vmatpush1.bf16.xpose.msra.mxu0 0
      %758 = vmatprep.subr.bf16.mxu0 0
      %759 = vmatpush1.bf16.xpose.msra.mxu0 0
      %760 = vmatprep.subr.bf16.mxu0 0
      %761 = vmatpush1.bf16.xpose.msra.mxu0 0
      %762 = vmatprep.mubr.bf16.mxu0 0
      %763 = vmatmul.mubr.bf16.gmra.mrb[0].mxu0 %v725
      %v764 = vpop.f32.mrb[0].mxu0
      %v765 = vadd.f32 0.0, %v764
      %v766 = vpop.f32.mrb[0].mxu0
      %v767 = vpop.f32.mrb[0].mxu0
      %v768 = vadd.f32 0.0, %v767
      %v769 = vpop.f32.mrb[0].mxu0
      %770 = vdwg.mxu0
      %v771 = vmul.f32 %v765, 0.25
      %v772 = vmul.f32 %v768, 0.25
      %v773 = vsel %vm336, %v771, -1e+30
      %v774 = vsel %vm337, %v772, -1e+30
      %v775 = vsel %vm348, %v773, -inf
      %776 = vmax.xlane.f32.xlu0 %v775
      %v777 = vpop.xlane.xlu0 %776
      %v778 = vsel %vm348, %v774, -inf
      %779 = vmax.xlane.f32.xlu0 %v778
      %v780 = vpop.xlane.xlu0 %779
      %v781 = vsub.f32 %v773, %v777
      %v782 = vsub.f32 %v774, %v780
      %v783 = vmul.f32 %v781, 1.442695
      %v784 = vpow.pop %v783
      %v785 = vmul.f32 %v782, 1.442695
      %v786 = vpow.pop %v785
      %v787 = vsel %vm348, %v784, 0.0
      %788 = vadd.xlane.f32.xlu0 %v787
      %v789 = vpop.xlane.xlu0 %788
      %v790 = vsel %vm348, %v786, 0.0
      %791 = vadd.xlane.f32.xlu0 %v790
      %v792 = vpop.xlane.xlu0 %791
      %v793 = vrcp.pop %v789
      %v794 = vrcp.pop %v792
      %v795 = vmul.f32 %v784, %v793
      %v796 = vmul.f32 %v786, %v794
      %v797 = vpack.c.bf16 %v796, %v795
      %798 = vrot.lane.b32.xlu0 %v347, 16
      %v799 = vpop.permute.xlu0 %798
      %v802 = vsel %vm348, %v797, 0
      %804 = vmatprep.subr.bf16.mxu0 0
      %805 = vmatpush1.bf16.msra.mxu0 %v799
      %806 = vmatprep.subr.bf16.mxu0 0
      %807 = vmatpush1.bf16.msra.mxu0 0
      %808 = vmatprep.subr.bf16.mxu0 0
      %809 = vmatpush1.bf16.msra.mxu0 0
      %810 = vmatprep.subr.bf16.mxu0 0
      %811 = vmatpush1.bf16.msra.mxu0 0
      %812 = vmatprep.subr.bf16.mxu0 0
      %813 = vmatpush1.bf16.msra.mxu0 0
      %814 = vmatprep.subr.bf16.mxu0 0
      %815 = vmatpush1.bf16.msra.mxu0 0
      %816 = vmatprep.subr.bf16.mxu0 0
      %817 = vmatpush1.bf16.msra.mxu0 0
      %818 = vmatprep.subr.bf16.mxu0 0
      %819 = vmatpush1.bf16.msra.mxu0 0
      %820 = vmatprep.subr.bf16.mxu0 0
      %821 = vmatpush1.bf16.msra.mxu0 0
      %822 = vmatprep.subr.bf16.mxu0 0
      %823 = vmatpush1.bf16.msra.mxu0 0
      %824 = vmatprep.subr.bf16.mxu0 0
      %825 = vmatpush1.bf16.msra.mxu0 0
      %826 = vmatprep.subr.bf16.mxu0 0
      %827 = vmatpush1.bf16.msra.mxu0 0
      %828 = vmatprep.subr.bf16.mxu0 0
      %829 = vmatpush1.bf16.msra.mxu0 0
      %830 = vmatprep.subr.bf16.mxu0 0
      %831 = vmatpush1.bf16.msra.mxu0 0
      %832 = vmatprep.subr.bf16.mxu0 0
      %833 = vmatpush1.bf16.msra.mxu0 0
      %834 = vmatprep.subr.bf16.mxu0 0
      %835 = vmatpush1.bf16.msra.mxu0 0
      %836 = vmatprep.mubr.bf16.mxu0 0
      %837 = vmatmul.mubr.bf16.gmra.mrb[0].mxu0 %v802
      %v838 = vpop.f32.mrb[0].mxu0
      %v839 = vadd.f32 0.0, %v838
      %v840 = vpop.f32.mrb[0].mxu0
      %v841 = vpop.f32.mrb[0].mxu0
      %v842 = vadd.f32 0.0, %v841
      %v843 = vpop.f32.mrb[0].mxu0
      %844 = vdwg.mxu0
      %847 = vrot.lane.b32.xlu0 %v589, 16
      %v848 = vpop.permute.xlu0 %847
      %849 = vrot.lane.b32.xlu0 %v592, 16
      %v850 = vpop.permute.xlu0 %849
      %855 = vrot.lane.b32.xlu0 %v714, 32
      %v856 = vpop.permute.xlu0 %855
      %857 = vrot.lane.b32.xlu0 %v717, 32
      %v858 = vpop.permute.xlu0 %857
      %863 = vrot.lane.b32.xlu0 %v839, 48
      %v864 = vpop.permute.xlu0 %863
      %865 = vrot.lane.b32.xlu0 %v842, 48
      %v866 = vpop.permute.xlu0 %865
      %v869 = vsel %vm348, %v464, %v848
      %v870 = vsel %vm348, %v467, %v850
      %vm871 = vcmask 261120
      %v872 = vsel %vm871, %v869, %v856
      %v873 = vsel %vm871, %v870, %v858
      %vm874 = vcmask 392192
      %v875 = vsel %vm874, %v872, %v864
      %v876 = vsel %vm874, %v873, %v866
      %v877 = vpack.c.bf16 %v876, %v875
      %v878 = vld [vmem:[%s3] sm:$0xf]
      %v879 = vld [vmem:[%s3 + $0x4] sm:$0xf]
      %v880 = vld [vmem:[%s3 + $0x8] sm:$0xf]
      %v881 = vld [vmem:[%s3 + $0xc] sm:$0xf]
      %v882 = vld [vmem:[%s3 + $0x10] sm:$0xf]
      %v883 = vld [vmem:[%s3 + $0x14] sm:$0xf]
      %v884 = vld [vmem:[%s3 + $0x18] sm:$0xf]
      %v885 = vld [vmem:[%s3 + $0x1c] sm:$0xf]
      %v894 = vunpack.c.l.b16 %v878
      %v895 = vunpack.c.l.b16 %v879
      %v896 = vunpack.c.l.b16 %v880
      %v897 = vunpack.c.l.b16 %v881
      %v898 = vunpack.c.l.b16 %v882
      %v899 = vunpack.c.l.b16 %v883
      %v900 = vunpack.c.l.b16 %v884
      %v901 = vunpack.c.l.b16 %v885
      %v902 = vpack.c.b16 %v895, %v894
      %v903 = vpack.c.b16 %v897, %v896
      %v904 = vpack.c.b16 %v899, %v898
      %v905 = vpack.c.b16 %v901, %v900
      %vm910 = vcmask 523264
      %v912 = vsel %vm910, %v877, 0
      %914 = vmatprep.subr.bf16.mxu0 0
      %915 = vmatpush1.bf16.msra.mxu0 %v902
      %916 = vmatprep.subr.bf16.mxu0 0
      %917 = vmatpush1.bf16.msra.mxu0 %v903
      %918 = vmatprep.subr.bf16.mxu0 0
      %919 = vmatpush1.bf16.msra.mxu0 %v904
      %920 = vmatprep.subr.bf16.mxu0 0
      %921 = vmatpush1.bf16.msra.mxu0 %v905
      %922 = vmatprep.subr.bf16.mxu0 0
      %923 = vmatpush1.bf16.msra.mxu0 0
      %924 = vmatprep.subr.bf16.mxu0 0
      %925 = vmatpush1.bf16.msra.mxu0 0
      %926 = vmatprep.subr.bf16.mxu0 0
      %927 = vmatpush1.bf16.msra.mxu0 0
      %928 = vmatprep.subr.bf16.mxu0 0
      %929 = vmatpush1.bf16.msra.mxu0 0
      %930 = vmatprep.subr.bf16.mxu0 0
      %931 = vmatpush1.bf16.msra.mxu0 0
      %932 = vmatprep.subr.bf16.mxu0 0
      %933 = vmatpush1.bf16.msra.mxu0 0
      %934 = vmatprep.subr.bf16.mxu0 0
      %935 = vmatpush1.bf16.msra.mxu0 0
      %936 = vmatprep.subr.bf16.mxu0 0
      %937 = vmatpush1.bf16.msra.mxu0 0
      %938 = vmatprep.subr.bf16.mxu0 0
      %939 = vmatpush1.bf16.msra.mxu0 0
      %940 = vmatprep.subr.bf16.mxu0 0
      %941 = vmatpush1.bf16.msra.mxu0 0
      %942 = vmatprep.subr.bf16.mxu0 0
      %943 = vmatpush1.bf16.msra.mxu0 0
      %944 = vmatprep.subr.bf16.mxu0 0
      %945 = vmatpush1.bf16.msra.mxu0 0
      %946 = vmatprep.mubr.bf16.mxu0 0
      %947 = vmatmul.mubr.bf16.gmra.mrb[0].mxu0 %v912
      %v948 = vpop.f32.mrb[0].mxu0
      %v949 = vadd.f32 0.0, %v948
      %v950 = vpop.f32.mrb[0].mxu0
      %v951 = vpop.f32.mrb[0].mxu0
      %v952 = vadd.f32 0.0, %v951
      %v953 = vpop.f32.mrb[0].mxu0
      %954 = vdwg.mxu0
      %v955 = vmul.f32 %v949, %v949
      %v956 = vmul.f32 %v952, %v952
      %v957 = vsel %vm910, %v955, 0.0
      %958 = vadd.xlane.f32.xlu0 %v957
      %v959 = vpop.xlane.xlu0 %958
      %v960 = vsel %vm910, %v956, 0.0
      %961 = vadd.xlane.f32.xlu0 %v960
      %v962 = vpop.xlane.xlu0 %961
      %v963 = vmax.f32 %v959, 1e-12
      %v964 = vmax.f32 %v962, 1e-12
      %v965 = vrsqrt.pop %v963
      %v966 = vrsqrt.pop %v964
      %v967 = vmul.f32 %v949, %v965
      %v968 = vmul.f32 %v952, %v966
      %v969 = vld [vmem:[%s4] sm:$0x1]
      %v970 = vsub.f32 %v967, %v321
      %v971 = vsub.f32 %v968, %v322
      %v973 = vlaneseq
      %v974 = vshrl.u32 %v973, 7
      %v975 = vsub.s32 0, %v974
      %v976 = vrot.slane %v969, %v975
      %v978 = vmul.f32 %v976, %v970
      %v979 = vmul.f32 %v976, %v971
      %v980 = vadd.f32 %v321, %v978
      %v981 = vadd.f32 %v322, %v979
      %v982 = vmul.f32 %v980, %v980
      %v983 = vmul.f32 %v981, %v981
      %v984 = vsel %vm910, %v982, 0.0
      %985 = vadd.xlane.f32.xlu0 %v984
      %v986 = vpop.xlane.xlu0 %985
      %v987 = vsel %vm910, %v983, 0.0
      %988 = vadd.xlane.f32.xlu0 %v987
      %v989 = vpop.xlane.xlu0 %988
      %v990 = vmax.f32 %v986, 1e-12
      %v991 = vmax.f32 %v989, 1e-12
      %v992 = vrsqrt.pop %v990
      %v993 = vrsqrt.pop %v991
      %v994 = vmul.f32 %v980, %v992
      %v995 = vmul.f32 %v981, %v993
      %996 = vst.msk [vmem:[%s318] sm:$0xff] %vm910, %v994
      %997 = vst.msk [vmem:[%s318 + $0x8] sm:$0xff] %vm910, %v995
      %s998 = smul.u32 2, %s21
      %p999 = scmp.lt.s32.totalorder %s20, 1
      %s1000 = scalar_select %p999, %s20, 1
      %p1001 = scmp.lt.s32.totalorder %s998, 1
      %s1002 = scalar_select %p1001, %s998, 1
      %s1003 = smul.addr %s1000, 2
      %s1004 = sadd.s32 %s1002, %s1003
      %s1005 = smul.addr %s1004, 8
      %s1006 = scalar_lea.vmem %s5, %s1005
      // Predicated region
      $region41: #{ngpt_forward.8} parent=39 // pred_check
        %p1007 = pneg %p172
      $region42: #{ngpt_forward.8} parent=39 // pred_check_branch
        %1009 = sbr.rel (%p1007) target = $region44
      $region43: #{ngpt_forward.8} parent=39 // pred_region
        %s1010 = smul.u32 2, %s21
      $region44: #{ngpt_forward.8} parent=39 // pred_fallthru
        _
    $region40: #{ngpt_forward.8} parent=5 // pred_fallthru
      _
    %p1011 = scmp.le.s32.totalorder 2, %s11
    // Predicated region
    $region45: #{ngpt_forward.8} parent=5 // pred_check
      %p1012 = pneg %p1011
    $region46: #{ngpt_forward.8} parent=5 // pred_check_branch
      %1014 = sbr.rel (%p1012) target = $region48
    $region47: #{ngpt_forward.8} parent=5 // pred_region
      %s1015 = ssub.s32 %s11, 2
      // Predicated region
      $region49: #{ngpt_forward.8} parent=47 // pred_check
        %p1016 = pneg %p178
      $region50: #{ngpt_forward.8} parent=47 // pred_check_branch
        %1018 = sbr.rel (%p1016) target = $region52
      $region51: #{ngpt_forward.8} parent=47 // pred_region
        %s1019 = smul.u32 2, %s23
        %p1020 = scmp.lt.s32.totalorder %s22, 1
        %s1021 = scalar_select %p1020, %s22, 1
        %p1022 = scmp.lt.s32.totalorder %s1019, 1
        %s1023 = scalar_select %p1022, %s1019, 1
        %s1024 = smul.addr %s1021, 2
        %s1025 = sadd.s32 %s1023, %s1024
        %s1026 = smul.addr %s1025, 8
        %s1027 = scalar_lea.vmem %s5, %s1026
      $region52: #{ngpt_forward.8} parent=47 // pred_fallthru
        _
    $region48: #{ngpt_forward.8} parent=5 // pred_fallthru
      _
  $region6: #{ngpt_forward.8} parent=0 // loop_footer
    %s15 = sadd.s32 1, %s11
  $region7: #{ngpt_forward.8} parent=0 // loop_footer_branch
    %10 = sbr.rel target = $region3
  $region8: #{ngpt_forward.8} parent=0 // loop_exit
    _

</llo_original>
